<compile_context>
chip_gen: v5e
topology: v5e:2x2
jax: 0.10.0
libtpu: 0.0.40
codegen_flags: <defaults>
</compile_context>

<pallas_src>
import math
from functools import partial

import jax
import jax.numpy as jnp
from jax.experimental import pallas as pl
from jax.experimental.pallas import tpu as pltpu

EPS = 1e-6          # EPS used in vn_layers
BN_EPS = 1e-5       # nn.BatchNorm2d default eps
NEG_SLOPE = 0.2     # VNLinearLeakyReLU default negative_slope


# ---------------------------------------------------------------------------
# Generation-aware tiling / VMEM budgeting
# ---------------------------------------------------------------------------
def _round_up(v, m):
    return ((v + m - 1) // m) * m


def _vmem_limit_bytes():
    """Scoped-VMEM limit: ~48 MiB on v7x (64 MiB phys), ~96 MiB on v5e/v6e."""
    try:
        cap = int(pltpu.get_tpu_info().vmem_capacity_bytes)
    except Exception:
        cap = 64 * 1024 * 1024
    return min((cap * 3) // 4, 100 * 1024 * 1024)


def _pick_tile_n(n, c, cout, k, vmem_limit):
    """Pick the point-tile TN (multiple of 128) under VMEM and vreg budgets."""
    n_pad = _round_up(n, 128)
    kc_pad = _round_up(k * c, 8)
    c_pad = _round_up(c, 8)
    cout_pad = _round_up(cout, 8)
    budget = vmem_limit // 2
    for cand in (2048, 1024, 512, 384, 256, 128):
        if cand > n_pad or n_pad % cand != 0:
            continue
        blocks = (kc_pad * 3 * cand * 2 * 2        # x_nbr bf16, double-buffered
                  + c_pad * 3 * cand * 2 * 2       # x_ctr bf16, double-buffered
                  + 3 * cout_pad * cand * 4 * 2    # f32 output block
                  + cout_pad * 3 * cand * 4)       # f32 accumulator scratch
        # dominant transient live values per neighbor iteration (vreg pressure)
        transient = (2 * cout_pad * 3 * cand + 8 * cout_pad * cand) * 4
        if blocks <= budget and transient <= 192 * 1024:
            return cand, n_pad
    return 128, n_pad


# ---------------------------------------------------------------------------
# Pallas kernels
# ---------------------------------------------------------------------------
def _vn_stats_kernel(x_nbr_ref, x_ctr_ref, wa_ref, wb_ref, o_ref, *, k, n_valid):
    """Pass 1: per-batch partial sums of ||p|| and ||p||^2 for the BN stats."""
    t = pl.program_id(1)

    @pl.when(t == 0)
    def _():
        o_ref[...] = jnp.zeros_like(o_ref)

    cin = x_ctr_ref.shape[-2]                    # C (per-neighbor channels)
    tn = x_ctr_ref.shape[-1] // 3
    cout = wa_ref.shape[0]

    wa = wa_ref[...]                             # (Cout, C) bf16
    ctr = jnp.dot(wb_ref[...], x_ctr_ref[0, 0],
                  preferred_element_type=jnp.float32)            # (Cout, 3TN)

    s1 = jnp.zeros((cout, tn), jnp.float32)
    s2 = jnp.zeros((cout, tn), jnp.float32)
    for j in range(k):                           # unrolled neighbor loop
        slab = x_nbr_ref[0, 0, j * cin:(j + 1) * cin, :]          # (C, 3TN)
        p = jnp.dot(wa, slab, preferred_element_type=jnp.float32) + ctr
        p0, p1, p2 = p[:, :tn], p[:, tn:2 * tn], p[:, 2 * tn:]
        norm = jnp.sqrt(p0 * p0 + p1 * p1 + p2 * p2) + EPS
        s1 = s1 + norm
        s2 = s2 + norm * norm

    # mask out the zero-padded tail of the point axis (keeps BN stats exact)
    lane = jax.lax.broadcasted_iota(jnp.int32, (1, tn), 1) + t * tn
    valid = lane < n_valid
    s1 = jnp.where(valid, s1, 0.0)
    s2 = jnp.where(valid, s2, 0.0)

    both = jnp.concatenate([s1, s2], axis=0)                      # (2Cout, TN)
    o_ref[0] += jnp.sum(both, axis=-1, keepdims=True)             # (2Cout, 1)


def _vn_fused_kernel(x_nbr_ref, x_ctr_ref, wa_ref, wb_ref, mean_ref, invstd_ref,
                     o_ref, acc_ref, *, k):
    """Pass 2: recombined linear + VN-BatchNorm + VN-LeakyReLU + mean pool."""
    cin = x_ctr_ref.shape[-2]
    tn = x_ctr_ref.shape[-1] // 3
    cout = mean_ref.shape[0]

    wa = wa_ref[...]                             # (2Cout, C) bf16 [Wf_nbr;Wd_nbr]
    mean = mean_ref[...]                         # (Cout, 1) f32
    invstd = invstd_ref[...]                     # (Cout, 1) f32
    ctr = jnp.dot(wb_ref[...], x_ctr_ref[0, 0],
                  preferred_element_type=jnp.float32)            # (2Cout, 3TN)

    acc_ref[...] = jnp.zeros_like(acc_ref)       # VMEM accumulator (Cout, 3TN)

    for j in range(k):
        slab = x_nbr_ref[0, 0, j * cin:(j + 1) * cin, :]          # (C, 3TN)
        pd = jnp.dot(wa, slab, preferred_element_type=jnp.float32) + ctr
        p, d = pd[:cout], pd[cout:]                               # (Cout, 3TN)
        p0, p1, p2 = p[:, :tn], p[:, tn:2 * tn], p[:, 2 * tn:]
        d0, d1, d2 = d[:, :tn], d[:, tn:2 * tn], d[:, 2 * tn:]

        # VN batch-norm on the vector norm (gamma=1, beta=0, batch statistics)
        norm = jnp.sqrt(p0 * p0 + p1 * p1 + p2 * p2) + EPS
        scale = (norm - mean) * invstd / norm                     # exact divide

        # VN leaky-ReLU: x_out = pb - (1-ns) * (1-mask) * (<pb,d>/(|d|^2+eps)) * d
        dotpd = (p0 * d0 + p1 * d1 + p2 * d2) * scale             # <pb, d>
        dsq = d0 * d0 + d1 * d1 + d2 * d2
        cd = jnp.where(dotpd < 0.0, dotpd / (dsq + EPS), 0.0)

        scale3 = jnp.concatenate([scale, scale, scale], axis=1)   # (Cout, 3TN)
        cd3 = jnp.concatenate([cd, cd, cd], axis=1)
        acc_ref[...] += p * scale3 - (1.0 - NEG_SLOPE) * cd3 * d

    res = acc_ref[...] * (1.0 / k)               # mean pool over neighbors
    o_ref[0, 0] = res[:, :tn]
    o_ref[0, 1] = res[:, tn:2 * tn]
    o_ref[0, 2] = res[:, 2 * tn:]


# ---------------------------------------------------------------------------
# Glue (data-dependent knn gather stays in plain JAX)
# ---------------------------------------------------------------------------
def _knn_idx(x, k):
    """x: (B, C, 3, N) f32 -> idx (B, N, k): k nearest neighbors per point."""
    B, C, _, N = x.shape
    xf = x.reshape(B, C * 3, N)
    inner = -2.0 * jnp.einsum('bcn,bcm->bnm', xf, xf)
    xx = jnp.sum(xf * xf, axis=1)                                 # (B, N)
    pairwise = -xx[:, :, None] - inner - xx[:, None, :]
    return jax.lax.top_k(pairwise, k)[1]


def _prep_graph_inputs(x, idx, tn, n_pad):
    """Gathered neighbor + center features in kernel layout (bf16).

    x_nbr: (B, nT, k*C, 3*TN)  x_nbr[b,t,j*C+c, comp*TN+p] = x[b,c,comp, idx[b, t*TN+p, j]]
    x_ctr: (B, nT, C,   3*TN)  x_ctr[b,t,c,     comp*TN+p] = x[b,c,comp, t*TN+p]
    """
    B, C, _, N = x.shape
    k = idx.shape[-1]
    nT = n_pad // tn

    xt = jnp.transpose(x, (0, 3, 1, 2))                           # (B, N, C, 3)
    feat = xt[jnp.arange(B)[:, None, None], idx]                  # (B, N, k, C, 3)
    feat = jnp.pad(feat, ((0, 0), (0, n_pad - N), (0, 0), (0, 0), (0, 0)))
    feat = feat.reshape(B, nT, tn, k, C, 3)
    feat = jnp.transpose(feat, (0, 1, 3, 4, 5, 2))                # (B,nT,k,C,3,TN)
    x_nbr = feat.reshape(B, nT, k * C, 3 * tn).astype(jnp.bfloat16)

    xc = jnp.pad(x, ((0, 0), (0, 0), (0, 0), (0, n_pad - N)))     # (B, C, 3, Np)
    xc = xc.reshape(B, C, 3, nT, tn)
    xc = jnp.transpose(xc, (0, 3, 1, 2, 4))                       # (B,nT,C,3,TN)
    x_ctr = xc.reshape(B, nT, C, 3 * tn).astype(jnp.bfloat16)
    return x_nbr, x_ctr


def vn_dgcnn_forward(x, w_feat, w_dir, k):
    """VNDGCNN.forward: x (B, C, 3, N) -> (B, Cout, 3, N) with mean pooling."""
    B, C, _, N = x.shape
    cin = 2 * C
    cout = w_feat.shape[0]
    assert w_feat.shape == (cout, cin) and w_dir.shape == (cout, cin)

    vmem_limit = _vmem_limit_bytes()
    tn, n_pad = _pick_tile_n(N, C, cout, k, vmem_limit)
    nT = n_pad // tn

    idx = _knn_idx(x, k)
    x_nbr, x_ctr = _prep_graph_inputs(x, idx, tn, n_pad)

    # Recombine the [nbr - ctr ; ctr] channel concat into the weights:
    #   p = Wf[:, :C] @ nbr + (Wf[:, C:] - Wf[:, :C]) @ ctr     (same for d)
    wa = jnp.concatenate([w_feat[:, :C], w_dir[:, :C]], axis=0)            # (2Cout, C)
    wb = jnp.concatenate([w_feat[:, C:] - w_feat[:, :C],
                          w_dir[:, C:] - w_dir[:, :C]], axis=0)            # (2Cout, C)
    wa = wa.astype(jnp.bfloat16)
    wb = wb.astype(jnp.bfloat16)
    wa_f, wb_f = wa[:cout], wb[:cout]                                      # feature halves

    nbr_spec = pl.BlockSpec((1, 1, k * C, 3 * tn), lambda b, t: (b, t, 0, 0))
    ctr_spec = pl.BlockSpec((1, 1, C, 3 * tn), lambda b, t: (b, t, 0, 0))
    wf_spec = pl.BlockSpec((cout, C), lambda b, t: (0, 0))
    w_spec = pl.BlockSpec((2 * cout, C), lambda b, t: (0, 0))
    stat_spec = pl.BlockSpec((cout, 1), lambda b, t: (0, 0))

    # --- pass 1: BN batch statistics (accumulated over the tile axis) -------
    sums = pl.pallas_call(
        partial(_vn_stats_kernel, k=k, n_valid=N),
        out_shape=jax.ShapeDtypeStruct((B, 2 * cout, 1), jnp.float32),
        grid_spec=pltpu.PrefetchScalarGridSpec(
            num_scalar_prefetch=0,
            grid=(B, nT),
            in_specs=[nbr_spec, ctr_spec, wf_spec, wf_spec],
            out_specs=pl.BlockSpec((1, 2 * cout, 1), lambda b, t: (b, 0, 0)),
        ),
        compiler_params=pltpu.CompilerParams(
            dimension_semantics=("parallel", "arbitrary"),
            vmem_limit_bytes=vmem_limit),
    )(x_nbr, x_ctr, wa_f, wb_f)

    cnt = float(B * N * k)
    s = jnp.sum(sums[:, :, 0], axis=0)                            # (2Cout,)
    mean = s[:cout] / cnt
    var = jnp.maximum(s[cout:] / cnt - mean * mean, 0.0)          # biased batch var
    invstd = jax.lax.rsqrt(var + BN_EPS)
    mean = mean.reshape(cout, 1)
    invstd = invstd.reshape(cout, 1)

    # --- pass 2: fused linear + VN-BN + VN-LeakyReLU + mean pool ------------
    out = pl.pallas_call(
        partial(_vn_fused_kernel, k=k),
        out_shape=jax.ShapeDtypeStruct((B, 3, cout, n_pad), jnp.float32),
        grid_spec=pltpu.PrefetchScalarGridSpec(
            num_scalar_prefetch=0,
            grid=(B, nT),
            in_specs=[nbr_spec, ctr_spec, w_spec, w_spec, stat_spec, stat_spec],
            out_specs=pl.BlockSpec((1, 3, cout, tn), lambda b, t: (b, 0, 0, t)),
            scratch_shapes=[pltpu.VMEM((cout, 3 * tn), jnp.float32)],
        ),
        compiler_params=pltpu.CompilerParams(
            dimension_semantics=("parallel", "parallel"),
            vmem_limit_bytes=vmem_limit),
    )(x_nbr, x_ctr, wa, wb, mean, invstd)

    out = out[:, :, :, :N]                                        # drop point padding
    return jnp.transpose(out, (0, 2, 1, 3))                       # (B, Cout, 3, N)


if __name__ == "__main__":
    # VNDGCNN(in_feat=4, out_feat=8, k=4, pooling='mean');
    # input has C = in_feat // 2 = 2 vector channels (get_graph_feature doubles).
    B, C, N = 2, 2, 16
    in_feat, out_feat, knn_k = 2 * C, 8, 4

    key = jax.random.PRNGKey(0)
    k1, k2, k3 = jax.random.split(key, 3)
    bound = 1.0 / math.sqrt(in_feat)
    w_feat = jax.random.uniform(k1, (out_feat, in_feat), jnp.float32,
                                minval=-bound, maxval=bound)
    w_dir = jax.random.uniform(k2, (out_feat, in_feat), jnp.float32,
                               minval=-bound, maxval=bound)
    x = jax.random.normal(k3, (B, C, 3, N), dtype=jnp.float32)

    fwd = jax.jit(vn_dgcnn_forward, static_argnames=("k",))
    out = fwd(x, w_feat, w_dir, k=knn_k)
    jax.block_until_ready(out)
    assert out.shape == (B, out_feat, 3, N)
    print("KERNEL_OK")
</pallas_src>

<mosaic_0001>
module attributes {stable_mosaic.version = 11 : i64} {
  func.func @_vn_stats_kernel(%arg0: i32, %arg1: i32, %arg2: memref<1x1x8x384xbf16, #tpu.memory_space<vmem>>, %arg3: memref<1x1x2x384xbf16, #tpu.memory_space<vmem>>, %arg4: memref<8x2xbf16, #tpu.memory_space<vmem>>, %arg5: memref<8x2xbf16, #tpu.memory_space<vmem>>, %arg6: memref<1x16x1xf32, #tpu.memory_space<vmem>>) attributes {dimension_semantics = [#tpu.dimension_semantics<parallel>, #tpu.dimension_semantics<arbitrary>], iteration_bounds = array<i64: 2, 1>, scalar_prefetch = 0 : i64, scratch_operands = 0 : i64, tpu.core_type = #tpu.core_type<tc>, window_params = [{transform_indices = @transform_0, window_bounds = array<i64: 1, 1, 8, 384>}, {transform_indices = @transform_1, window_bounds = array<i64: 1, 1, 2, 384>}, {pipeline_mode = #tpu.pipeline_mode<synchronous>, transform_indices = @transform_2, window_bounds = array<i64: 8, 2>}, {pipeline_mode = #tpu.pipeline_mode<synchronous>, transform_indices = @transform_3, window_bounds = array<i64: 8, 2>}, {transform_indices = @transform_4, window_bounds = array<i64: 1, 16, 1>}]} {
    %c0_i32 = arith.constant 0 : i32
    %0 = arith.cmpi eq, %arg1, %c0_i32 : i32
    %1 = arith.extui %0 : i1 to i32
    %c0_i32_0 = arith.constant 0 : i32
    %2 = arith.cmpi ne, %1, %c0_i32_0 : i32
    scf.if %2 {
      %cst_40 = arith.constant 0.000000e+00 : f32
      %105 = vector.broadcast %cst_40 : f32 to vector<1x16x1xf32>
      %c0_41 = arith.constant 0 : index
      %c0_42 = arith.constant 0 : index
      %c0_43 = arith.constant 0 : index
      %106 = vector.load %arg6[%c0_41, %c0_42, %c0_43] : memref<1x16x1xf32, #tpu.memory_space<vmem>>, vector<1x16x1xf32>
      tpu.vector_store %arg6[%c0_41, %c0_42, %c0_43], %105 {strides = array<i32>} : memref<1x16x1xf32, #tpu.memory_space<vmem>>, vector<1x16x1xf32>,
    } else {
    }
    %c0 = arith.constant 0 : index
    %c0_1 = arith.constant 0 : index
    %3 = vector.load %arg4[%c0, %c0_1] : memref<8x2xbf16, #tpu.memory_space<vmem>>, vector<8x2xbf16>
    %c0_2 = arith.constant 0 : index
    %c0_3 = arith.constant 0 : index
    %4 = vector.load %arg5[%c0_2, %c0_3] : memref<8x2xbf16, #tpu.memory_space<vmem>>, vector<8x2xbf16>
    %c0_4 = arith.constant 0 : index
    %c0_5 = arith.constant 0 : index
    %c0_6 = arith.constant 0 : index
    %c0_7 = arith.constant 0 : index
    %5 = vector.load %arg3[%c0_4, %c0_5, %c0_6, %c0_7] : memref<1x1x2x384xbf16, #tpu.memory_space<vmem>>, vector<1x1x2x384xbf16>
    %6 = vector.shape_cast %5 : vector<1x1x2x384xbf16> to vector<2x384xbf16>
    %cst = arith.constant dense<0.000000e+00> : vector<8x384xf32>
    %7 = tpu.matmul %4, %6, %cst {dimension_numbers = #tpu.dot_dimension_numbers<[1], [0], [0], [1], [0, 0, 1, 1], [], []>} : vector<8x2xbf16>, vector<2x384xbf16>, vector<8x384xf32> -> vector<8x384xf32>
    %cst_8 = arith.constant 0.000000e+00 : f32
    %8 = vector.broadcast %cst_8 : f32 to vector<8x128xf32>
    %cst_9 = arith.constant 0.000000e+00 : f32
    %9 = vector.broadcast %cst_9 : f32 to vector<8x128xf32>
    %c0_10 = arith.constant 0 : index
    %c0_11 = arith.constant 0 : index
    %c0_12 = arith.constant 0 : index
    %c0_13 = arith.constant 0 : index
    %10 = vector.load %arg2[%c0_10, %c0_11, %c0_12, %c0_13] : memref<1x1x8x384xbf16, #tpu.memory_space<vmem>>, vector<1x1x2x384xbf16>
    %11 = vector.shape_cast %10 : vector<1x1x2x384xbf16> to vector<2x384xbf16>
    %cst_14 = arith.constant dense<0.000000e+00> : vector<8x384xf32>
    %12 = tpu.matmul %3, %11, %cst_14 {dimension_numbers = #tpu.dot_dimension_numbers<[1], [0], [0], [1], [0, 0, 1, 1], [], []>} : vector<8x2xbf16>, vector<2x384xbf16>, vector<8x384xf32> -> vector<8x384xf32>
    %13 = arith.addf %12, %7 : vector<8x384xf32>
    %14 = vector.extract_strided_slice %13 {offsets = [0, 0], sizes = [8, 128], strides = [1, 1]} : vector<8x384xf32> to vector<8x128xf32>
    %15 = vector.extract_strided_slice %13 {offsets = [0, 128], sizes = [8, 128], strides = [1, 1]} : vector<8x384xf32> to vector<8x128xf32>
    %16 = vector.extract_strided_slice %13 {offsets = [0, 256], sizes = [8, 128], strides = [1, 1]} : vector<8x384xf32> to vector<8x128xf32>
    %17 = arith.mulf %14, %14 : vector<8x128xf32>
    %18 = arith.mulf %15, %15 : vector<8x128xf32>
    %19 = arith.addf %17, %18 : vector<8x128xf32>
    %20 = arith.mulf %16, %16 : vector<8x128xf32>
    %21 = arith.addf %19, %20 : vector<8x128xf32>
    %22 = math.sqrt %21 : vector<8x128xf32>
    %cst_15 = arith.constant 9.99999997E-7 : f32
    %23 = vector.broadcast %cst_15 : f32 to vector<8x128xf32>
    %24 = arith.addf %22, %23 : vector<8x128xf32>
    %25 = arith.addf %8, %24 : vector<8x128xf32>
    %26 = arith.mulf %24, %24 : vector<8x128xf32>
    %27 = arith.addf %9, %26 : vector<8x128xf32>
    %c0_16 = arith.constant 0 : index
    %c0_17 = arith.constant 0 : index
    %c2 = arith.constant 2 : index
    %c0_18 = arith.constant 0 : index
    %28 = vector.load %arg2[%c0_16, %c0_17, %c2, %c0_18] : memref<1x1x8x384xbf16, #tpu.memory_space<vmem>>, vector<1x1x2x384xbf16>
    %29 = vector.shape_cast %28 : vector<1x1x2x384xbf16> to vector<2x384xbf16>
    %cst_19 = arith.constant dense<0.000000e+00> : vector<8x384xf32>
    %30 = tpu.matmul %3, %29, %cst_19 {dimension_numbers = #tpu.dot_dimension_numbers<[1], [0], [0], [1], [0, 0, 1, 1], [], []>} : vector<8x2xbf16>, vector<2x384xbf16>, vector<8x384xf32> -> vector<8x384xf32>
    %31 = arith.addf %30, %7 : vector<8x384xf32>
    %32 = vector.extract_strided_slice %31 {offsets = [0, 0], sizes = [8, 128], strides = [1, 1]} : vector<8x384xf32> to vector<8x128xf32>
    %33 = vector.extract_strided_slice %31 {offsets = [0, 128], sizes = [8, 128], strides = [1, 1]} : vector<8x384xf32> to vector<8x128xf32>
    %34 = vector.extract_strided_slice %31 {offsets = [0, 256], sizes = [8, 128], strides = [1, 1]} : vector<8x384xf32> to vector<8x128xf32>
    %35 = arith.mulf %32, %32 : vector<8x128xf32>
    %36 = arith.mulf %33, %33 : vector<8x128xf32>
    %37 = arith.addf %35, %36 : vector<8x128xf32>
    %38 = arith.mulf %34, %34 : vector<8x128xf32>
    %39 = arith.addf %37, %38 : vector<8x128xf32>
    %40 = math.sqrt %39 : vector<8x128xf32>
    %cst_20 = arith.constant 9.99999997E-7 : f32
    %41 = vector.broadcast %cst_20 : f32 to vector<8x128xf32>
    %42 = arith.addf %40, %41 : vector<8x128xf32>
    %43 = arith.addf %25, %42 : vector<8x128xf32>
    %44 = arith.mulf %42, %42 : vector<8x128xf32>
    %45 = arith.addf %27, %44 : vector<8x128xf32>
    %c0_21 = arith.constant 0 : index
    %c0_22 = arith.constant 0 : index
    %c4 = arith.constant 4 : index
    %c0_23 = arith.constant 0 : index
    %46 = vector.load %arg2[%c0_21, %c0_22, %c4, %c0_23] : memref<1x1x8x384xbf16, #tpu.memory_space<vmem>>, vector<1x1x2x384xbf16>
    %47 = vector.shape_cast %46 : vector<1x1x2x384xbf16> to vector<2x384xbf16>
    %cst_24 = arith.constant dense<0.000000e+00> : vector<8x384xf32>
    %48 = tpu.matmul %3, %47, %cst_24 {dimension_numbers = #tpu.dot_dimension_numbers<[1], [0], [0], [1], [0, 0, 1, 1], [], []>} : vector<8x2xbf16>, vector<2x384xbf16>, vector<8x384xf32> -> vector<8x384xf32>
    %49 = arith.addf %48, %7 : vector<8x384xf32>
    %50 = vector.extract_strided_slice %49 {offsets = [0, 0], sizes = [8, 128], strides = [1, 1]} : vector<8x384xf32> to vector<8x128xf32>
    %51 = vector.extract_strided_slice %49 {offsets = [0, 128], sizes = [8, 128], strides = [1, 1]} : vector<8x384xf32> to vector<8x128xf32>
    %52 = vector.extract_strided_slice %49 {offsets = [0, 256], sizes = [8, 128], strides = [1, 1]} : vector<8x384xf32> to vector<8x128xf32>
    %53 = arith.mulf %50, %50 : vector<8x128xf32>
    %54 = arith.mulf %51, %51 : vector<8x128xf32>
    %55 = arith.addf %53, %54 : vector<8x128xf32>
    %56 = arith.mulf %52, %52 : vector<8x128xf32>
    %57 = arith.addf %55, %56 : vector<8x128xf32>
    %58 = math.sqrt %57 : vector<8x128xf32>
    %cst_25 = arith.constant 9.99999997E-7 : f32
    %59 = vector.broadcast %cst_25 : f32 to vector<8x128xf32>
    %60 = arith.addf %58, %59 : vector<8x128xf32>
    %61 = arith.addf %43, %60 : vector<8x128xf32>
    %62 = arith.mulf %60, %60 : vector<8x128xf32>
    %63 = arith.addf %45, %62 : vector<8x128xf32>
    %c0_26 = arith.constant 0 : index
    %c0_27 = arith.constant 0 : index
    %c6 = arith.constant 6 : index
    %c0_28 = arith.constant 0 : index
    %64 = vector.load %arg2[%c0_26, %c0_27, %c6, %c0_28] : memref<1x1x8x384xbf16, #tpu.memory_space<vmem>>, vector<1x1x2x384xbf16>
    %65 = vector.shape_cast %64 : vector<1x1x2x384xbf16> to vector<2x384xbf16>
    %cst_29 = arith.constant dense<0.000000e+00> : vector<8x384xf32>
    %66 = tpu.matmul %3, %65, %cst_29 {dimension_numbers = #tpu.dot_dimension_numbers<[1], [0], [0], [1], [0, 0, 1, 1], [], []>} : vector<8x2xbf16>, vector<2x384xbf16>, vector<8x384xf32> -> vector<8x384xf32>
    %67 = arith.addf %66, %7 : vector<8x384xf32>
    %68 = vector.extract_strided_slice %67 {offsets = [0, 0], sizes = [8, 128], strides = [1, 1]} : vector<8x384xf32> to vector<8x128xf32>
    %69 = vector.extract_strided_slice %67 {offsets = [0, 128], sizes = [8, 128], strides = [1, 1]} : vector<8x384xf32> to vector<8x128xf32>
    %70 = vector.extract_strided_slice %67 {offsets = [0, 256], sizes = [8, 128], strides = [1, 1]} : vector<8x384xf32> to vector<8x128xf32>
    %71 = arith.mulf %68, %68 : vector<8x128xf32>
    %72 = arith.mulf %69, %69 : vector<8x128xf32>
    %73 = arith.addf %71, %72 : vector<8x128xf32>
    %74 = arith.mulf %70, %70 : vector<8x128xf32>
    %75 = arith.addf %73, %74 : vector<8x128xf32>
    %76 = math.sqrt %75 : vector<8x128xf32>
    %cst_30 = arith.constant 9.99999997E-7 : f32
    %77 = vector.broadcast %cst_30 : f32 to vector<8x128xf32>
    %78 = arith.addf %76, %77 : vector<8x128xf32>
    %79 = arith.addf %61, %78 : vector<8x128xf32>
    %80 = arith.mulf %78, %78 : vector<8x128xf32>
    %81 = arith.addf %63, %80 : vector<8x128xf32>
    %82 = tpu.iota {dimensions = array<i32: 1>} : vector<1x128xi32>
    %c128_i32 = arith.constant 128 : i32
    %83 = arith.muli %arg1, %c128_i32 : i32
    %84 = vector.broadcast %83 : i32 to vector<1x128xi32>
    %85 = arith.addi %82, %84 : vector<1x128xi32>
    %c16_i32 = arith.constant 16 : i32
    %86 = vector.broadcast %c16_i32 : i32 to vector<1x128xi32>
    %87 = arith.cmpi slt, %85, %86 : vector<1x128xi32>
    %cst_31 = arith.constant 0.000000e+00 : f32
    %88 = vector.shape_cast %87 : vector<1x128xi1> to vector<1x128xi1>
    %89 = vector.broadcast %88 : vector<1x128xi1> to vector<8x128xi1>
    %90 = vector.broadcast %cst_31 : f32 to vector<8x128xf32>
    %91 = arith.select %89, %79, %90 : vector<8x128xi1>, vector<8x128xf32>
    %cst_32 = arith.constant 0.000000e+00 : f32
    %92 = vector.shape_cast %87 : vector<1x128xi1> to vector<1x128xi1>
    %93 = vector.broadcast %92 : vector<1x128xi1> to vector<8x128xi1>
    %94 = vector.broadcast %cst_32 : f32 to vector<8x128xf32>
    %95 = arith.select %93, %81, %94 : vector<8x128xi1>, vector<8x128xf32>
    %96 = tpu.concatenate %91, %95 in 0 : vector<8x128xf32>, vector<8x128xf32> -> vector<16x128xf32>
    %c0_33 = arith.constant 0 : index
    %c0_34 = arith.constant 0 : index
    %c0_35 = arith.constant 0 : index
    %97 = vector.load %arg6[%c0_33, %c0_34, %c0_35] : memref<1x16x1xf32, #tpu.memory_space<vmem>>, vector<1x16x1xf32>
    %98 = vector.shape_cast %97 : vector<1x16x1xf32> to vector<16x1xf32>
    %cst_36 = arith.constant dense<0.000000e+00> : vector<16xf32>
    %99 = vector.multi_reduction <add>, %96, %cst_36 [1] : vector<16x128xf32> to vector<16xf32>
    %100 = vector.shape_cast %99 : vector<16xf32> to vector<16x1xf32>
    %101 = arith.addf %98, %100 : vector<16x1xf32>
    %c0_37 = arith.constant 0 : index
    %c0_38 = arith.constant 0 : index
    %c0_39 = arith.constant 0 : index
    %102 = vector.load %arg6[%c0_37, %c0_38, %c0_39] : memref<1x16x1xf32, #tpu.memory_space<vmem>>, vector<1x16x1xf32>
    %103 = vector.shape_cast %102 : vector<1x16x1xf32> to vector<16x1xf32>
    %104 = vector.shape_cast %101 : vector<16x1xf32> to vector<1x16x1xf32>
    tpu.vector_store %arg6[%c0_37, %c0_38, %c0_39], %104 {strides = array<i32>} : memref<1x16x1xf32, #tpu.memory_space<vmem>>, vector<1x16x1xf32>,
    return
  }
  func.func @transform_0(%arg0: i32, %arg1: i32) -> (i32, i32, i32, i32) {
    %c0_i32 = arith.constant 0 : i32
    %c0_i32_0 = arith.constant 0 : i32
    %c0_i32_1 = arith.constant 0 : i32
    return %arg0, %arg1, %c0_i32, %c0_i32_0 : i32, i32, i32, i32
  }
  func.func @transform_1(%arg0: i32, %arg1: i32) -> (i32, i32, i32, i32) {
    %c0_i32 = arith.constant 0 : i32
    %c0_i32_0 = arith.constant 0 : i32
    %c0_i32_1 = arith.constant 0 : i32
    return %arg0, %arg1, %c0_i32, %c0_i32_0 : i32, i32, i32, i32
  }
  func.func @transform_2(%arg0: i32, %arg1: i32) -> (i32, i32) {
    %c0_i32 = arith.constant 0 : i32
    %c0_i32_0 = arith.constant 0 : i32
    %c0_i32_1 = arith.constant 0 : i32
    return %c0_i32, %c0_i32_0 : i32, i32
  }
  func.func @transform_3(%arg0: i32, %arg1: i32) -> (i32, i32) {
    %c0_i32 = arith.constant 0 : i32
    %c0_i32_0 = arith.constant 0 : i32
    %c0_i32_1 = arith.constant 0 : i32
    return %c0_i32, %c0_i32_0 : i32, i32
  }
  func.func @transform_4(%arg0: i32, %arg1: i32) -> (i32, i32, i32) {
    %c0_i32 = arith.constant 0 : i32
    %c0_i32_0 = arith.constant 0 : i32
    %c0_i32_1 = arith.constant 0 : i32
    return %arg0, %c0_i32, %c0_i32_0 : i32, i32, i32
  }
}

module attributes {stable_mosaic.version = 11 : i64} {
  func.func @_vn_fused_kernel(%arg0: i32, %arg1: i32, %arg2: memref<1x1x8x384xbf16, #tpu.memory_space<vmem>>, %arg3: memref<1x1x2x384xbf16, #tpu.memory_space<vmem>>, %arg4: memref<16x2xbf16, #tpu.memory_space<vmem>>, %arg5: memref<16x2xbf16, #tpu.memory_space<vmem>>, %arg6: memref<8x1xf32, #tpu.memory_space<vmem>>, %arg7: memref<8x1xf32, #tpu.memory_space<vmem>>, %arg8: memref<1x3x8x128xf32, #tpu.memory_space<vmem>>, %arg9: memref<8x384xf32, #tpu.memory_space<vmem>>) attributes {dimension_semantics = [#tpu.dimension_semantics<parallel>, #tpu.dimension_semantics<parallel>], iteration_bounds = array<i64: 2, 1>, scalar_prefetch = 0 : i64, scratch_operands = 1 : i64, tpu.core_type = #tpu.core_type<tc>, window_params = [{transform_indices = @transform_0, window_bounds = array<i64: 1, 1, 8, 384>}, {transform_indices = @transform_1, window_bounds = array<i64: 1, 1, 2, 384>}, {pipeline_mode = #tpu.pipeline_mode<synchronous>, transform_indices = @transform_2, window_bounds = array<i64: 16, 2>}, {pipeline_mode = #tpu.pipeline_mode<synchronous>, transform_indices = @transform_3, window_bounds = array<i64: 16, 2>}, {pipeline_mode = #tpu.pipeline_mode<synchronous>, transform_indices = @transform_4, window_bounds = array<i64: 8, 1>}, {pipeline_mode = #tpu.pipeline_mode<synchronous>, transform_indices = @transform_5, window_bounds = array<i64: 8, 1>}, {transform_indices = @transform_6, window_bounds = array<i64: 1, 3, 8, 128>}]} {
    %c0 = arith.constant 0 : index
    %c0_0 = arith.constant 0 : index
    %0 = vector.load %arg4[%c0, %c0_0] : memref<16x2xbf16, #tpu.memory_space<vmem>>, vector<16x2xbf16>
    %c0_1 = arith.constant 0 : index
    %c0_2 = arith.constant 0 : index
    %1 = vector.load %arg6[%c0_1, %c0_2] : memref<8x1xf32, #tpu.memory_space<vmem>>, vector<8x1xf32>
    %c0_3 = arith.constant 0 : index
    %c0_4 = arith.constant 0 : index
    %2 = vector.load %arg7[%c0_3, %c0_4] : memref<8x1xf32, #tpu.memory_space<vmem>>, vector<8x1xf32>
    %c0_5 = arith.constant 0 : index
    %c0_6 = arith.constant 0 : index
    %3 = vector.load %arg5[%c0_5, %c0_6] : memref<16x2xbf16, #tpu.memory_space<vmem>>, vector<16x2xbf16>
    %c0_7 = arith.constant 0 : index
    %c0_8 = arith.constant 0 : index
    %c0_9 = arith.constant 0 : index
    %c0_10 = arith.constant 0 : index
    %4 = vector.load %arg3[%c0_7, %c0_8, %c0_9, %c0_10] : memref<1x1x2x384xbf16, #tpu.memory_space<vmem>>, vector<1x1x2x384xbf16>
    %5 = vector.shape_cast %4 : vector<1x1x2x384xbf16> to vector<2x384xbf16>
    %cst = arith.constant dense<0.000000e+00> : vector<16x384xf32>
    %6 = tpu.matmul %3, %5, %cst {dimension_numbers = #tpu.dot_dimension_numbers<[1], [0], [0], [1], [0, 0, 1, 1], [], []>} : vector<16x2xbf16>, vector<2x384xbf16>, vector<16x384xf32> -> vector<16x384xf32>
    %cst_11 = arith.constant 0.000000e+00 : f32
    %7 = vector.broadcast %cst_11 : f32 to vector<8x384xf32>
    %c0_12 = arith.constant 0 : index
    %c0_13 = arith.constant 0 : index
    %8 = vector.load %arg9[%c0_12, %c0_13] : memref<8x384xf32, #tpu.memory_space<vmem>>, vector<8x384xf32>
    tpu.vector_store %arg9[%c0_12, %c0_13], %7 {strides = array<i32>} : memref<8x384xf32, #tpu.memory_space<vmem>>, vector<8x384xf32>,
    %c0_14 = arith.constant 0 : index
    %c0_15 = arith.constant 0 : index
    %c0_16 = arith.constant 0 : index
    %c0_17 = arith.constant 0 : index
    %9 = vector.load %arg2[%c0_14, %c0_15, %c0_16, %c0_17] : memref<1x1x8x384xbf16, #tpu.memory_space<vmem>>, vector<1x1x2x384xbf16>
    %10 = vector.shape_cast %9 : vector<1x1x2x384xbf16> to vector<2x384xbf16>
    %cst_18 = arith.constant dense<0.000000e+00> : vector<16x384xf32>
    %11 = tpu.matmul %0, %10, %cst_18 {dimension_numbers = #tpu.dot_dimension_numbers<[1], [0], [0], [1], [0, 0, 1, 1], [], []>} : vector<16x2xbf16>, vector<2x384xbf16>, vector<16x384xf32> -> vector<16x384xf32>
    %12 = arith.addf %11, %6 : vector<16x384xf32>
    %13 = vector.extract_strided_slice %12 {offsets = [0, 0], sizes = [8, 384], strides = [1, 1]} : vector<16x384xf32> to vector<8x384xf32>
    %14 = vector.extract_strided_slice %12 {offsets = [8, 0], sizes = [8, 384], strides = [1, 1]} : vector<16x384xf32> to vector<8x384xf32>
    %15 = vector.extract_strided_slice %13 {offsets = [0, 0], sizes = [8, 128], strides = [1, 1]} : vector<8x384xf32> to vector<8x128xf32>
    %16 = vector.extract_strided_slice %13 {offsets = [0, 128], sizes = [8, 128], strides = [1, 1]} : vector<8x384xf32> to vector<8x128xf32>
    %17 = vector.extract_strided_slice %13 {offsets = [0, 256], sizes = [8, 128], strides = [1, 1]} : vector<8x384xf32> to vector<8x128xf32>
    %18 = vector.extract_strided_slice %14 {offsets = [0, 0], sizes = [8, 128], strides = [1, 1]} : vector<8x384xf32> to vector<8x128xf32>
    %19 = vector.extract_strided_slice %14 {offsets = [0, 128], sizes = [8, 128], strides = [1, 1]} : vector<8x384xf32> to vector<8x128xf32>
    %20 = vector.extract_strided_slice %14 {offsets = [0, 256], sizes = [8, 128], strides = [1, 1]} : vector<8x384xf32> to vector<8x128xf32>
    %21 = arith.mulf %15, %15 : vector<8x128xf32>
    %22 = arith.mulf %16, %16 : vector<8x128xf32>
    %23 = arith.addf %21, %22 : vector<8x128xf32>
    %24 = arith.mulf %17, %17 : vector<8x128xf32>
    %25 = arith.addf %23, %24 : vector<8x128xf32>
    %26 = math.sqrt %25 : vector<8x128xf32>
    %cst_19 = arith.constant 9.99999997E-7 : f32
    %27 = vector.broadcast %cst_19 : f32 to vector<8x128xf32>
    %28 = arith.addf %26, %27 : vector<8x128xf32>
    %29 = vector.broadcast %1 : vector<8x1xf32> to vector<8x128xf32>
    %30 = arith.subf %28, %29 : vector<8x128xf32>
    %31 = vector.broadcast %2 : vector<8x1xf32> to vector<8x128xf32>
    %32 = arith.mulf %30, %31 : vector<8x128xf32>
    %33 = arith.divf %32, %28 : vector<8x128xf32>
    %34 = arith.mulf %15, %18 : vector<8x128xf32>
    %35 = arith.mulf %16, %19 : vector<8x128xf32>
    %36 = arith.addf %34, %35 : vector<8x128xf32>
    %37 = arith.mulf %17, %20 : vector<8x128xf32>
    %38 = arith.addf %36, %37 : vector<8x128xf32>
    %39 = arith.mulf %38, %33 : vector<8x128xf32>
    %40 = arith.mulf %18, %18 : vector<8x128xf32>
    %41 = arith.mulf %19, %19 : vector<8x128xf32>
    %42 = arith.addf %40, %41 : vector<8x128xf32>
    %43 = arith.mulf %20, %20 : vector<8x128xf32>
    %44 = arith.addf %42, %43 : vector<8x128xf32>
    %cst_20 = arith.constant 0.000000e+00 : f32
    %45 = vector.broadcast %cst_20 : f32 to vector<8x128xf32>
    %46 = arith.cmpf olt, %39, %45 : vector<8x128xf32>
    %cst_21 = arith.constant 9.99999997E-7 : f32
    %47 = vector.broadcast %cst_21 : f32 to vector<8x128xf32>
    %48 = arith.addf %44, %47 : vector<8x128xf32>
    %49 = arith.divf %39, %48 : vector<8x128xf32>
    %cst_22 = arith.constant 0.000000e+00 : f32
    %50 = vector.broadcast %cst_22 : f32 to vector<8x128xf32>
    %51 = arith.select %46, %49, %50 : vector<8x128xi1>, vector<8x128xf32>
    %52 = tpu.concatenate %33, %33, %33 in 1 : vector<8x128xf32>, vector<8x128xf32>, vector<8x128xf32> -> vector<8x384xf32>
    %53 = tpu.concatenate %51, %51, %51 in 1 : vector<8x128xf32>, vector<8x128xf32>, vector<8x128xf32> -> vector<8x384xf32>
    %c0_23 = arith.constant 0 : index
    %c0_24 = arith.constant 0 : index
    %54 = vector.load %arg9[%c0_23, %c0_24] : memref<8x384xf32, #tpu.memory_space<vmem>>, vector<8x384xf32>
    %55 = arith.mulf %13, %52 : vector<8x384xf32>
    %cst_25 = arith.constant 8.000000e-01 : f32
    %56 = vector.broadcast %cst_25 : f32 to vector<8x384xf32>
    %57 = arith.mulf %56, %53 : vector<8x384xf32>
    %58 = arith.mulf %57, %14 : vector<8x384xf32>
    %59 = arith.subf %55, %58 : vector<8x384xf32>
    %60 = arith.addf %54, %59 : vector<8x384xf32>
    %c0_26 = arith.constant 0 : index
    %c0_27 = arith.constant 0 : index
    %61 = vector.load %arg9[%c0_26, %c0_27] : memref<8x384xf32, #tpu.memory_space<vmem>>, vector<8x384xf32>
    tpu.vector_store %arg9[%c0_26, %c0_27], %60 {strides = array<i32>} : memref<8x384xf32, #tpu.memory_space<vmem>>, vector<8x384xf32>,
    %c0_28 = arith.constant 0 : index
    %c0_29 = arith.constant 0 : index
    %c2 = arith.constant 2 : index
    %c0_30 = arith.constant 0 : index
    %62 = vector.load %arg2[%c0_28, %c0_29, %c2, %c0_30] : memref<1x1x8x384xbf16, #tpu.memory_space<vmem>>, vector<1x1x2x384xbf16>
    %63 = vector.shape_cast %62 : vector<1x1x2x384xbf16> to vector<2x384xbf16>
    %cst_31 = arith.constant dense<0.000000e+00> : vector<16x384xf32>
    %64 = tpu.matmul %0, %63, %cst_31 {dimension_numbers = #tpu.dot_dimension_numbers<[1], [0], [0], [1], [0, 0, 1, 1], [], []>} : vector<16x2xbf16>, vector<2x384xbf16>, vector<16x384xf32> -> vector<16x384xf32>
    %65 = arith.addf %64, %6 : vector<16x384xf32>
    %66 = vector.extract_strided_slice %65 {offsets = [0, 0], sizes = [8, 384], strides = [1, 1]} : vector<16x384xf32> to vector<8x384xf32>
    %67 = vector.extract_strided_slice %65 {offsets = [8, 0], sizes = [8, 384], strides = [1, 1]} : vector<16x384xf32> to vector<8x384xf32>
    %68 = vector.extract_strided_slice %66 {offsets = [0, 0], sizes = [8, 128], strides = [1, 1]} : vector<8x384xf32> to vector<8x128xf32>
    %69 = vector.extract_strided_slice %66 {offsets = [0, 128], sizes = [8, 128], strides = [1, 1]} : vector<8x384xf32> to vector<8x128xf32>
    %70 = vector.extract_strided_slice %66 {offsets = [0, 256], sizes = [8, 128], strides = [1, 1]} : vector<8x384xf32> to vector<8x128xf32>
    %71 = vector.extract_strided_slice %67 {offsets = [0, 0], sizes = [8, 128], strides = [1, 1]} : vector<8x384xf32> to vector<8x128xf32>
    %72 = vector.extract_strided_slice %67 {offsets = [0, 128], sizes = [8, 128], strides = [1, 1]} : vector<8x384xf32> to vector<8x128xf32>
    %73 = vector.extract_strided_slice %67 {offsets = [0, 256], sizes = [8, 128], strides = [1, 1]} : vector<8x384xf32> to vector<8x128xf32>
    %74 = arith.mulf %68, %68 : vector<8x128xf32>
    %75 = arith.mulf %69, %69 : vector<8x128xf32>
    %76 = arith.addf %74, %75 : vector<8x128xf32>
    %77 = arith.mulf %70, %70 : vector<8x128xf32>
    %78 = arith.addf %76, %77 : vector<8x128xf32>
    %79 = math.sqrt %78 : vector<8x128xf32>
    %cst_32 = arith.constant 9.99999997E-7 : f32
    %80 = vector.broadcast %cst_32 : f32 to vector<8x128xf32>
    %81 = arith.addf %79, %80 : vector<8x128xf32>
    %82 = vector.broadcast %1 : vector<8x1xf32> to vector<8x128xf32>
    %83 = arith.subf %81, %82 : vector<8x128xf32>
    %84 = vector.broadcast %2 : vector<8x1xf32> to vector<8x128xf32>
    %85 = arith.mulf %83, %84 : vector<8x128xf32>
    %86 = arith.divf %85, %81 : vector<8x128xf32>
    %87 = arith.mulf %68, %71 : vector<8x128xf32>
    %88 = arith.mulf %69, %72 : vector<8x128xf32>
    %89 = arith.addf %87, %88 : vector<8x128xf32>
    %90 = arith.mulf %70, %73 : vector<8x128xf32>
    %91 = arith.addf %89, %90 : vector<8x128xf32>
    %92 = arith.mulf %91, %86 : vector<8x128xf32>
    %93 = arith.mulf %71, %71 : vector<8x128xf32>
    %94 = arith.mulf %72, %72 : vector<8x128xf32>
    %95 = arith.addf %93, %94 : vector<8x128xf32>
    %96 = arith.mulf %73, %73 : vector<8x128xf32>
    %97 = arith.addf %95, %96 : vector<8x128xf32>
    %cst_33 = arith.constant 0.000000e+00 : f32
    %98 = vector.broadcast %cst_33 : f32 to vector<8x128xf32>
    %99 = arith.cmpf olt, %92, %98 : vector<8x128xf32>
    %cst_34 = arith.constant 9.99999997E-7 : f32
    %100 = vector.broadcast %cst_34 : f32 to vector<8x128xf32>
    %101 = arith.addf %97, %100 : vector<8x128xf32>
    %102 = arith.divf %92, %101 : vector<8x128xf32>
    %cst_35 = arith.constant 0.000000e+00 : f32
    %103 = vector.broadcast %cst_35 : f32 to vector<8x128xf32>
    %104 = arith.select %99, %102, %103 : vector<8x128xi1>, vector<8x128xf32>
    %105 = tpu.concatenate %86, %86, %86 in 1 : vector<8x128xf32>, vector<8x128xf32>, vector<8x128xf32> -> vector<8x384xf32>
    %106 = tpu.concatenate %104, %104, %104 in 1 : vector<8x128xf32>, vector<8x128xf32>, vector<8x128xf32> -> vector<8x384xf32>
    %c0_36 = arith.constant 0 : index
    %c0_37 = arith.constant 0 : index
    %107 = vector.load %arg9[%c0_36, %c0_37] : memref<8x384xf32, #tpu.memory_space<vmem>>, vector<8x384xf32>
    %108 = arith.mulf %66, %105 : vector<8x384xf32>
    %cst_38 = arith.constant 8.000000e-01 : f32
    %109 = vector.broadcast %cst_38 : f32 to vector<8x384xf32>
    %110 = arith.mulf %109, %106 : vector<8x384xf32>
    %111 = arith.mulf %110, %67 : vector<8x384xf32>
    %112 = arith.subf %108, %111 : vector<8x384xf32>
    %113 = arith.addf %107, %112 : vector<8x384xf32>
    %c0_39 = arith.constant 0 : index
    %c0_40 = arith.constant 0 : index
    %114 = vector.load %arg9[%c0_39, %c0_40] : memref<8x384xf32, #tpu.memory_space<vmem>>, vector<8x384xf32>
    tpu.vector_store %arg9[%c0_39, %c0_40], %113 {strides = array<i32>} : memref<8x384xf32, #tpu.memory_space<vmem>>, vector<8x384xf32>,
    %c0_41 = arith.constant 0 : index
    %c0_42 = arith.constant 0 : index
    %c4 = arith.constant 4 : index
    %c0_43 = arith.constant 0 : index
    %115 = vector.load %arg2[%c0_41, %c0_42, %c4, %c0_43] : memref<1x1x8x384xbf16, #tpu.memory_space<vmem>>, vector<1x1x2x384xbf16>
    %116 = vector.shape_cast %115 : vector<1x1x2x384xbf16> to vector<2x384xbf16>
    %cst_44 = arith.constant dense<0.000000e+00> : vector<16x384xf32>
    %117 = tpu.matmul %0, %116, %cst_44 {dimension_numbers = #tpu.dot_dimension_numbers<[1], [0], [0], [1], [0, 0, 1, 1], [], []>} : vector<16x2xbf16>, vector<2x384xbf16>, vector<16x384xf32> -> vector<16x384xf32>
    %118 = arith.addf %117, %6 : vector<16x384xf32>
    %119 = vector.extract_strided_slice %118 {offsets = [0, 0], sizes = [8, 384], strides = [1, 1]} : vector<16x384xf32> to vector<8x384xf32>
    %120 = vector.extract_strided_slice %118 {offsets = [8, 0], sizes = [8, 384], strides = [1, 1]} : vector<16x384xf32> to vector<8x384xf32>
    %121 = vector.extract_strided_slice %119 {offsets = [0, 0], sizes = [8, 128], strides = [1, 1]} : vector<8x384xf32> to vector<8x128xf32>
    %122 = vector.extract_strided_slice %119 {offsets = [0, 128], sizes = [8, 128], strides = [1, 1]} : vector<8x384xf32> to vector<8x128xf32>
    %123 = vector.extract_strided_slice %119 {offsets = [0, 256], sizes = [8, 128], strides = [1, 1]} : vector<8x384xf32> to vector<8x128xf32>
    %124 = vector.extract_strided_slice %120 {offsets = [0, 0], sizes = [8, 128], strides = [1, 1]} : vector<8x384xf32> to vector<8x128xf32>
    %125 = vector.extract_strided_slice %120 {offsets = [0, 128], sizes = [8, 128], strides = [1, 1]} : vector<8x384xf32> to vector<8x128xf32>
    %126 = vector.extract_strided_slice %120 {offsets = [0, 256], sizes = [8, 128], strides = [1, 1]} : vector<8x384xf32> to vector<8x128xf32>
    %127 = arith.mulf %121, %121 : vector<8x128xf32>
    %128 = arith.mulf %122, %122 : vector<8x128xf32>
    %129 = arith.addf %127, %128 : vector<8x128xf32>
    %130 = arith.mulf %123, %123 : vector<8x128xf32>
    %131 = arith.addf %129, %130 : vector<8x128xf32>
    %132 = math.sqrt %131 : vector<8x128xf32>
    %cst_45 = arith.constant 9.99999997E-7 : f32
    %133 = vector.broadcast %cst_45 : f32 to vector<8x128xf32>
    %134 = arith.addf %132, %133 : vector<8x128xf32>
    %135 = vector.broadcast %1 : vector<8x1xf32> to vector<8x128xf32>
    %136 = arith.subf %134, %135 : vector<8x128xf32>
    %137 = vector.broadcast %2 : vector<8x1xf32> to vector<8x128xf32>
    %138 = arith.mulf %136, %137 : vector<8x128xf32>
    %139 = arith.divf %138, %134 : vector<8x128xf32>
    %140 = arith.mulf %121, %124 : vector<8x128xf32>
    %141 = arith.mulf %122, %125 : vector<8x128xf32>
    %142 = arith.addf %140, %141 : vector<8x128xf32>
    %143 = arith.mulf %123, %126 : vector<8x128xf32>
    %144 = arith.addf %142, %143 : vector<8x128xf32>
    %145 = arith.mulf %144, %139 : vector<8x128xf32>
    %146 = arith.mulf %124, %124 : vector<8x128xf32>
    %147 = arith.mulf %125, %125 : vector<8x128xf32>
    %148 = arith.addf %146, %147 : vector<8x128xf32>
    %149 = arith.mulf %126, %126 : vector<8x128xf32>
    %150 = arith.addf %148, %149 : vector<8x128xf32>
    %cst_46 = arith.constant 0.000000e+00 : f32
    %151 = vector.broadcast %cst_46 : f32 to vector<8x128xf32>
    %152 = arith.cmpf olt, %145, %151 : vector<8x128xf32>
    %cst_47 = arith.constant 9.99999997E-7 : f32
    %153 = vector.broadcast %cst_47 : f32 to vector<8x128xf32>
    %154 = arith.addf %150, %153 : vector<8x128xf32>
    %155 = arith.divf %145, %154 : vector<8x128xf32>
    %cst_48 = arith.constant 0.000000e+00 : f32
    %156 = vector.broadcast %cst_48 : f32 to vector<8x128xf32>
    %157 = arith.select %152, %155, %156 : vector<8x128xi1>, vector<8x128xf32>
    %158 = tpu.concatenate %139, %139, %139 in 1 : vector<8x128xf32>, vector<8x128xf32>, vector<8x128xf32> -> vector<8x384xf32>
    %159 = tpu.concatenate %157, %157, %157 in 1 : vector<8x128xf32>, vector<8x128xf32>, vector<8x128xf32> -> vector<8x384xf32>
    %c0_49 = arith.constant 0 : index
    %c0_50 = arith.constant 0 : index
    %160 = vector.load %arg9[%c0_49, %c0_50] : memref<8x384xf32, #tpu.memory_space<vmem>>, vector<8x384xf32>
    %161 = arith.mulf %119, %158 : vector<8x384xf32>
    %cst_51 = arith.constant 8.000000e-01 : f32
    %162 = vector.broadcast %cst_51 : f32 to vector<8x384xf32>
    %163 = arith.mulf %162, %159 : vector<8x384xf32>
    %164 = arith.mulf %163, %120 : vector<8x384xf32>
    %165 = arith.subf %161, %164 : vector<8x384xf32>
    %166 = arith.addf %160, %165 : vector<8x384xf32>
    %c0_52 = arith.constant 0 : index
    %c0_53 = arith.constant 0 : index
    %167 = vector.load %arg9[%c0_52, %c0_53] : memref<8x384xf32, #tpu.memory_space<vmem>>, vector<8x384xf32>
    tpu.vector_store %arg9[%c0_52, %c0_53], %166 {strides = array<i32>} : memref<8x384xf32, #tpu.memory_space<vmem>>, vector<8x384xf32>,
    %c0_54 = arith.constant 0 : index
    %c0_55 = arith.constant 0 : index
    %c6 = arith.constant 6 : index
    %c0_56 = arith.constant 0 : index
    %168 = vector.load %arg2[%c0_54, %c0_55, %c6, %c0_56] : memref<1x1x8x384xbf16, #tpu.memory_space<vmem>>, vector<1x1x2x384xbf16>
    %169 = vector.shape_cast %168 : vector<1x1x2x384xbf16> to vector<2x384xbf16>
    %cst_57 = arith.constant dense<0.000000e+00> : vector<16x384xf32>
    %170 = tpu.matmul %0, %169, %cst_57 {dimension_numbers = #tpu.dot_dimension_numbers<[1], [0], [0], [1], [0, 0, 1, 1], [], []>} : vector<16x2xbf16>, vector<2x384xbf16>, vector<16x384xf32> -> vector<16x384xf32>
    %171 = arith.addf %170, %6 : vector<16x384xf32>
    %172 = vector.extract_strided_slice %171 {offsets = [0, 0], sizes = [8, 384], strides = [1, 1]} : vector<16x384xf32> to vector<8x384xf32>
    %173 = vector.extract_strided_slice %171 {offsets = [8, 0], sizes = [8, 384], strides = [1, 1]} : vector<16x384xf32> to vector<8x384xf32>
    %174 = vector.extract_strided_slice %172 {offsets = [0, 0], sizes = [8, 128], strides = [1, 1]} : vector<8x384xf32> to vector<8x128xf32>
    %175 = vector.extract_strided_slice %172 {offsets = [0, 128], sizes = [8, 128], strides = [1, 1]} : vector<8x384xf32> to vector<8x128xf32>
    %176 = vector.extract_strided_slice %172 {offsets = [0, 256], sizes = [8, 128], strides = [1, 1]} : vector<8x384xf32> to vector<8x128xf32>
    %177 = vector.extract_strided_slice %173 {offsets = [0, 0], sizes = [8, 128], strides = [1, 1]} : vector<8x384xf32> to vector<8x128xf32>
    %178 = vector.extract_strided_slice %173 {offsets = [0, 128], sizes = [8, 128], strides = [1, 1]} : vector<8x384xf32> to vector<8x128xf32>
    %179 = vector.extract_strided_slice %173 {offsets = [0, 256], sizes = [8, 128], strides = [1, 1]} : vector<8x384xf32> to vector<8x128xf32>
    %180 = arith.mulf %174, %174 : vector<8x128xf32>
    %181 = arith.mulf %175, %175 : vector<8x128xf32>
    %182 = arith.addf %180, %181 : vector<8x128xf32>
    %183 = arith.mulf %176, %176 : vector<8x128xf32>
    %184 = arith.addf %182, %183 : vector<8x128xf32>
    %185 = math.sqrt %184 : vector<8x128xf32>
    %cst_58 = arith.constant 9.99999997E-7 : f32
    %186 = vector.broadcast %cst_58 : f32 to vector<8x128xf32>
    %187 = arith.addf %185, %186 : vector<8x128xf32>
    %188 = vector.broadcast %1 : vector<8x1xf32> to vector<8x128xf32>
    %189 = arith.subf %187, %188 : vector<8x128xf32>
    %190 = vector.broadcast %2 : vector<8x1xf32> to vector<8x128xf32>
    %191 = arith.mulf %189, %190 : vector<8x128xf32>
    %192 = arith.divf %191, %187 : vector<8x128xf32>
    %193 = arith.mulf %174, %177 : vector<8x128xf32>
    %194 = arith.mulf %175, %178 : vector<8x128xf32>
    %195 = arith.addf %193, %194 : vector<8x128xf32>
    %196 = arith.mulf %176, %179 : vector<8x128xf32>
    %197 = arith.addf %195, %196 : vector<8x128xf32>
    %198 = arith.mulf %197, %192 : vector<8x128xf32>
    %199 = arith.mulf %177, %177 : vector<8x128xf32>
    %200 = arith.mulf %178, %178 : vector<8x128xf32>
    %201 = arith.addf %199, %200 : vector<8x128xf32>
    %202 = arith.mulf %179, %179 : vector<8x128xf32>
    %203 = arith.addf %201, %202 : vector<8x128xf32>
    %cst_59 = arith.constant 0.000000e+00 : f32
    %204 = vector.broadcast %cst_59 : f32 to vector<8x128xf32>
    %205 = arith.cmpf olt, %198, %204 : vector<8x128xf32>
    %cst_60 = arith.constant 9.99999997E-7 : f32
    %206 = vector.broadcast %cst_60 : f32 to vector<8x128xf32>
    %207 = arith.addf %203, %206 : vector<8x128xf32>
    %208 = arith.divf %198, %207 : vector<8x128xf32>
    %cst_61 = arith.constant 0.000000e+00 : f32
    %209 = vector.broadcast %cst_61 : f32 to vector<8x128xf32>
    %210 = arith.select %205, %208, %209 : vector<8x128xi1>, vector<8x128xf32>
    %211 = tpu.concatenate %192, %192, %192 in 1 : vector<8x128xf32>, vector<8x128xf32>, vector<8x128xf32> -> vector<8x384xf32>
    %212 = tpu.concatenate %210, %210, %210 in 1 : vector<8x128xf32>, vector<8x128xf32>, vector<8x128xf32> -> vector<8x384xf32>
    %c0_62 = arith.constant 0 : index
    %c0_63 = arith.constant 0 : index
    %213 = vector.load %arg9[%c0_62, %c0_63] : memref<8x384xf32, #tpu.memory_space<vmem>>, vector<8x384xf32>
    %214 = arith.mulf %172, %211 : vector<8x384xf32>
    %cst_64 = arith.constant 8.000000e-01 : f32
    %215 = vector.broadcast %cst_64 : f32 to vector<8x384xf32>
    %216 = arith.mulf %215, %212 : vector<8x384xf32>
    %217 = arith.mulf %216, %173 : vector<8x384xf32>
    %218 = arith.subf %214, %217 : vector<8x384xf32>
    %219 = arith.addf %213, %218 : vector<8x384xf32>
    %c0_65 = arith.constant 0 : index
    %c0_66 = arith.constant 0 : index
    %220 = vector.load %arg9[%c0_65, %c0_66] : memref<8x384xf32, #tpu.memory_space<vmem>>, vector<8x384xf32>
    tpu.vector_store %arg9[%c0_65, %c0_66], %219 {strides = array<i32>} : memref<8x384xf32, #tpu.memory_space<vmem>>, vector<8x384xf32>,
    %c0_67 = arith.constant 0 : index
    %c0_68 = arith.constant 0 : index
    %221 = vector.load %arg9[%c0_67, %c0_68] : memref<8x384xf32, #tpu.memory_space<vmem>>, vector<8x384xf32>
    %cst_69 = arith.constant 2.500000e-01 : f32
    %222 = vector.broadcast %cst_69 : f32 to vector<8x384xf32>
    %223 = arith.mulf %221, %222 : vector<8x384xf32>
    %224 = vector.extract_strided_slice %223 {offsets = [0, 0], sizes = [8, 128], strides = [1, 1]} : vector<8x384xf32> to vector<8x128xf32>
    %c0_70 = arith.constant 0 : index
    %c0_71 = arith.constant 0 : index
    %c0_72 = arith.constant 0 : index
    %c0_73 = arith.constant 0 : index
    %225 = vector.load %arg8[%c0_70, %c0_71, %c0_72, %c0_73] : memref<1x3x8x128xf32, #tpu.memory_space<vmem>>, vector<1x1x8x128xf32>
    %226 = vector.shape_cast %225 : vector<1x1x8x128xf32> to vector<8x128xf32>
    %227 = vector.shape_cast %224 : vector<8x128xf32> to vector<1x1x8x128xf32>
    tpu.vector_store %arg8[%c0_70, %c0_71, %c0_72, %c0_73], %227 {strides = array<i32>} : memref<1x3x8x128xf32, #tpu.memory_space<vmem>>, vector<1x1x8x128xf32>,
    %228 = vector.extract_strided_slice %223 {offsets = [0, 128], sizes = [8, 128], strides = [1, 1]} : vector<8x384xf32> to vector<8x128xf32>
    %c0_74 = arith.constant 0 : index
    %c1 = arith.constant 1 : index
    %c0_75 = arith.constant 0 : index
    %c0_76 = arith.constant 0 : index
    %229 = vector.load %arg8[%c0_74, %c1, %c0_75, %c0_76] : memref<1x3x8x128xf32, #tpu.memory_space<vmem>>, vector<1x1x8x128xf32>
    %230 = vector.shape_cast %229 : vector<1x1x8x128xf32> to vector<8x128xf32>
    %231 = vector.shape_cast %228 : vector<8x128xf32> to vector<1x1x8x128xf32>
    tpu.vector_store %arg8[%c0_74, %c1, %c0_75, %c0_76], %231 {strides = array<i32>} : memref<1x3x8x128xf32, #tpu.memory_space<vmem>>, vector<1x1x8x128xf32>,
    %232 = vector.extract_strided_slice %223 {offsets = [0, 256], sizes = [8, 128], strides = [1, 1]} : vector<8x384xf32> to vector<8x128xf32>
    %c0_77 = arith.constant 0 : index
    %c2_78 = arith.constant 2 : index
    %c0_79 = arith.constant 0 : index
    %c0_80 = arith.constant 0 : index
    %233 = vector.load %arg8[%c0_77, %c2_78, %c0_79, %c0_80] : memref<1x3x8x128xf32, #tpu.memory_space<vmem>>, vector<1x1x8x128xf32>
    %234 = vector.shape_cast %233 : vector<1x1x8x128xf32> to vector<8x128xf32>
    %235 = vector.shape_cast %232 : vector<8x128xf32> to vector<1x1x8x128xf32>
    tpu.vector_store %arg8[%c0_77, %c2_78, %c0_79, %c0_80], %235 {strides = array<i32>} : memref<1x3x8x128xf32, #tpu.memory_space<vmem>>, vector<1x1x8x128xf32>,
    return
  }
  func.func @transform_0(%arg0: i32, %arg1: i32) -> (i32, i32, i32, i32) {
    %c0_i32 = arith.constant 0 : i32
    %c0_i32_0 = arith.constant 0 : i32
    %c0_i32_1 = arith.constant 0 : i32
    return %arg0, %arg1, %c0_i32, %c0_i32_0 : i32, i32, i32, i32
  }
  func.func @transform_1(%arg0: i32, %arg1: i32) -> (i32, i32, i32, i32) {
    %c0_i32 = arith.constant 0 : i32
    %c0_i32_0 = arith.constant 0 : i32
    %c0_i32_1 = arith.constant 0 : i32
    return %arg0, %arg1, %c0_i32, %c0_i32_0 : i32, i32, i32, i32
  }
  func.func @transform_2(%arg0: i32, %arg1: i32) -> (i32, i32) {
    %c0_i32 = arith.constant 0 : i32
    %c0_i32_0 = arith.constant 0 : i32
    %c0_i32_1 = arith.constant 0 : i32
    return %c0_i32, %c0_i32_0 : i32, i32
  }
  func.func @transform_3(%arg0: i32, %arg1: i32) -> (i32, i32) {
    %c0_i32 = arith.constant 0 : i32
    %c0_i32_0 = arith.constant 0 : i32
    %c0_i32_1 = arith.constant 0 : i32
    return %c0_i32, %c0_i32_0 : i32, i32
  }
  func.func @transform_4(%arg0: i32, %arg1: i32) -> (i32, i32) {
    %c0_i32 = arith.constant 0 : i32
    %c0_i32_0 = arith.constant 0 : i32
    %c0_i32_1 = arith.constant 0 : i32
    return %c0_i32, %c0_i32_0 : i32, i32
  }
  func.func @transform_5(%arg0: i32, %arg1: i32) -> (i32, i32) {
    %c0_i32 = arith.constant 0 : i32
    %c0_i32_0 = arith.constant 0 : i32
    %c0_i32_1 = arith.constant 0 : i32
    return %c0_i32, %c0_i32_0 : i32, i32
  }
  func.func @transform_6(%arg0: i32, %arg1: i32) -> (i32, i32, i32, i32) {
    %c0_i32 = arith.constant 0 : i32
    %c0_i32_0 = arith.constant 0 : i32
    %c0_i32_1 = arith.constant 0 : i32
    return %arg0, %c0_i32, %c0_i32_0, %arg1 : i32, i32, i32, i32
  }
}

</mosaic_0001>

<llo_original>
// kernel: neg.0
$region0: #{neg.0}
  #allocation0 [shape = 's32[1]{0}', space=sflag, size = 0x4, scoped, tag = 'scoped memory for neg.0']
  %s0 = inlined_call_operand.vmem [shape: f32[2,16], index: 0, kind: input, shape index: {}]
  %s1 = inlined_call_operand.vmem [shape: f32[2,16], index: 1, kind: output, shape index: {}]
  %v2 = vld [vmem:[%s0] sm:$0x3]
  %3 = xla_tuple %v2
  %4 = xla_tuple %3
  %v5 = vxor.u32 %v2, 2147483648
  %6 = xla_tuple %v5
  %7 = vst [vmem:[%s1] sm:$0x3] %v5

// kernel: vn_dgcnn_forward.2
$region0: #{vn_dgcnn_forward.2}
  #allocation0 [shape = 'u32[]', space=smem, size = 0x4, offset = 0x4, fixed_abs, tag = 'smem constant byte address 0x4 - core index']
  #allocation1 [shape = 'u32[72,128]{1,0:T(1,128)}', space=vmem, size = 0x9000, scoped, tag = 'internal scratch']
  %s0 = inlined_call_operand.vmem [shape: bf16[2,1,8,384], index: 0, kind: input, shape index: {}]
  %s1 = inlined_call_operand.vmem [shape: bf16[2,1,2,384], index: 1, kind: input, shape index: {}]
  %s2 = inlined_call_operand.vmem [shape: bf16[8,2], index: 2, kind: input, shape index: {}]
  %s3 = inlined_call_operand.vmem [shape: bf16[8,2], index: 3, kind: input, shape index: {}]
  %s4 = inlined_call_operand.vmem [shape: f32[2,16,1], index: 4, kind: output, shape index: {}]
  %s5 = sld [smem:[#allocation0]]
  $region53: #{vn_dgcnn_forward.2} parent=0
    _
  %s7 = ssub.s32 1, %s5
  %s8 = scalar_select 0, %s7, %s5
  loop: start=0, step=1, limit=4
  $region2: #{vn_dgcnn_forward.2} parent=0 // loop_pre_header
    _
  $region3: #{vn_dgcnn_forward.2} parent=0 // loop_header
    %s10 = sphi 0, %s14
    %p11 = scmp.ge.s32.totalorder %s10, 4
    %s17 = sphi 0, %s29
    %s18 = sphi 0, %s25
    %s19 = sphi 0, %s17
    %s20 = sphi 0, %s18
    %s21 = sphi 0, %s19
    %s22 = sphi 0, %s20
    %s34 = sphi 0, %s36
    %s37 = sphi 0, %s34
    %s38 = sphi 0, %s37
    %s54 = sphi 0, %s38
    %s62 = sphi 0, %s64
    %s65 = sphi 0, %s62
    %s66 = sphi 0, %s65
    %s82 = sphi 0, %s66
    %s86 = sphi 0, %s86
    %s88 = sphi 0, %s86
    %s89 = sphi 0, %s88
    %s103 = sphi 0, %s89
    %s107 = sphi 0, %s107
    %s109 = sphi 0, %s107
    %s110 = sphi 0, %s109
    %s124 = sphi 0, %s110
    %s130 = sphi 0, %s132
    %s133 = sphi 0, %s130
    %s134 = sphi 0, %s133
    %s150 = sphi 0, %s134
  $region4: #{vn_dgcnn_forward.2} parent=0 // loop_header_branch
    %13 = sbr.rel (%p11) target = $region8
  $region5: #{vn_dgcnn_forward.2} parent=0 // loop_body
    %s15 = ssub.s32 %s10, 1
    %s16 = ssub.s32 %s10, 2
    %s23 = sadd.s32 1, %s18
    %p24 = scmp.ge.s32.totalorder %s23, 1
    %s25 = scalar_select %p24, 0, %s23
    %s26 = sadd.s32 1, %s17
    %s27 = scalar_select %p24, %s26, %s17
    %p28 = scmp.ge.s32.totalorder %s27, 2
    %s29 = scalar_select %p28, 0, %s27
    %s30 = ssub.s32 %s17, %s29
    %s31 = ssub.s32 %s18, %s25
    %s32 = sor.u32 %s30, %s31
    %p33 = scmp.eq.s32.totalorder %s32, 0
    %s35 = sadd.s32 %s34, 1
    %s36 = scalar_select %p33, %s34, %s35
    %p39 = pneg %p33
    %p40 = scmp.eq.s32.totalorder %s10, 1
    %p41 = por %p39, %p40
    %p42 = scmp.ne.s32.totalorder %s34, %s37
    %p43 = scmp.eq.s32.totalorder %s10, 0
    %p44 = por %p42, %p43
    %p45 = scmp.ne.s32.totalorder %s34, %s37
    %p46 = scmp.eq.s32.totalorder %s15, 1
    %p47 = por %p45, %p46
    %p48 = scmp.ne.s32.totalorder %s37, %s38
    %p49 = scmp.eq.s32.totalorder %s15, 0
    %p50 = por %p48, %p49
    %p51 = scmp.ne.s32.totalorder %s37, %s38
    %p52 = scmp.eq.s32.totalorder %s16, 1
    %p53 = por %p51, %p52
    %p55 = scmp.ne.s32.totalorder %s38, %s54
    %p56 = scmp.eq.s32.totalorder %s16, 0
    %p57 = por %p55, %p56
    %s58 = ssub.s32 %s17, %s29
    %s59 = ssub.s32 %s18, %s25
    %s60 = sor.u32 %s58, %s59
    %p61 = scmp.eq.s32.totalorder %s60, 0
    %s63 = sadd.s32 %s62, 1
    %s64 = scalar_select %p61, %s62, %s63
    %p67 = pneg %p61
    %p68 = scmp.eq.s32.totalorder %s10, 1
    %p69 = por %p67, %p68
    %p70 = scmp.ne.s32.totalorder %s62, %s65
    %p71 = scmp.eq.s32.totalorder %s10, 0
    %p72 = por %p70, %p71
    %p73 = scmp.ne.s32.totalorder %s62, %s65
    %p74 = scmp.eq.s32.totalorder %s15, 1
    %p75 = por %p73, %p74
    %p76 = scmp.ne.s32.totalorder %s65, %s66
    %p77 = scmp.eq.s32.totalorder %s15, 0
    %p78 = por %p76, %p77
    %p79 = scmp.ne.s32.totalorder %s65, %s66
    %p80 = scmp.eq.s32.totalorder %s16, 1
    %p81 = por %p79, %p80
    %p83 = scmp.ne.s32.totalorder %s66, %s82
    %p84 = scmp.eq.s32.totalorder %s16, 0
    %p85 = por %p83, %p84
    %s87 = sadd.s32 %s86, 1
    %p90 = scmp.eq.s32.totalorder %s10, 1
    %p91 = scmp.ne.s32.totalorder %s86, %s88
    %p92 = scmp.eq.s32.totalorder %s10, 0
    %p93 = por %p91, %p92
    %p94 = scmp.ne.s32.totalorder %s86, %s88
    %p95 = scmp.eq.s32.totalorder %s15, 1
    %p96 = por %p94, %p95
    %p97 = scmp.ne.s32.totalorder %s88, %s89
    %p98 = scmp.eq.s32.totalorder %s15, 0
    %p99 = por %p97, %p98
    %p100 = scmp.ne.s32.totalorder %s88, %s89
    %p101 = scmp.eq.s32.totalorder %s16, 1
    %p102 = por %p100, %p101
    %p104 = scmp.ne.s32.totalorder %s89, %s103
    %p105 = scmp.eq.s32.totalorder %s16, 0
    %p106 = por %p104, %p105
    %s108 = sadd.s32 %s107, 1
    %p111 = scmp.eq.s32.totalorder %s10, 1
    %p112 = scmp.ne.s32.totalorder %s107, %s109
    %p113 = scmp.eq.s32.totalorder %s10, 0
    %p114 = por %p112, %p113
    %p115 = scmp.ne.s32.totalorder %s107, %s109
    %p116 = scmp.eq.s32.totalorder %s15, 1
    %p117 = por %p115, %p116
    %p118 = scmp.ne.s32.totalorder %s109, %s110
    %p119 = scmp.eq.s32.totalorder %s15, 0
    %p120 = por %p118, %p119
    %p121 = scmp.ne.s32.totalorder %s109, %s110
    %p122 = scmp.eq.s32.totalorder %s16, 1
    %p123 = por %p121, %p122
    %p125 = scmp.ne.s32.totalorder %s110, %s124
    %p126 = scmp.eq.s32.totalorder %s16, 0
    %p127 = por %p125, %p126
    %s128 = ssub.s32 %s17, %s29
    %p129 = scmp.eq.s32.totalorder %s128, 0
    %s131 = sadd.s32 %s130, 1
    %s132 = scalar_select %p129, %s130, %s131
    %p135 = pneg %p129
    %p136 = scmp.eq.s32.totalorder %s10, 1
    %p137 = por %p135, %p136
    %p138 = scmp.ne.s32.totalorder %s130, %s133
    %p139 = scmp.eq.s32.totalorder %s10, 0
    %p140 = por %p138, %p139
    %p141 = scmp.ne.s32.totalorder %s130, %s133
    %p142 = scmp.eq.s32.totalorder %s15, 1
    %p143 = por %p141, %p142
    %p144 = scmp.ne.s32.totalorder %s133, %s134
    %p145 = scmp.eq.s32.totalorder %s15, 0
    %p146 = por %p144, %p145
    %p147 = scmp.ne.s32.totalorder %s133, %s134
    %p148 = scmp.eq.s32.totalorder %s16, 1
    %p149 = por %p147, %p148
    %p151 = scmp.ne.s32.totalorder %s134, %s150
    %p152 = scmp.eq.s32.totalorder %s16, 0
    %p153 = por %p151, %p152
    %p154 = scmp.le.s32.totalorder 1, %s10
    %p155 = scmp.lt.s32.totalorder %s10, 3
    %p156 = pnand %p154, %p155
    %p157 = pneg %p156
    // Predicated region
    $region9: #{vn_dgcnn_forward.2} parent=5 // pred_check
      _
    $region10: #{vn_dgcnn_forward.2} parent=5 // pred_check_branch
      %159 = sbr.rel (%p156) target = $region12
    $region11: #{vn_dgcnn_forward.2} parent=5 // pred_region
      %s160 = ssub.s32 %s10, 1
      // Predicated region
      $region13: #{vn_dgcnn_forward.2} parent=11 // pred_check
        %p161 = pneg %p99
      $region14: #{vn_dgcnn_forward.2} parent=11 // pred_check_branch
        %163 = sbr.rel (%p161) target = $region16
      $region15: #{vn_dgcnn_forward.2} parent=11 // pred_region
        _
      $region16: #{vn_dgcnn_forward.2} parent=11 // pred_fallthru
        _
      // Predicated region
      $region17: #{vn_dgcnn_forward.2} parent=11 // pred_check
        %p164 = pneg %p120
      $region18: #{vn_dgcnn_forward.2} parent=11 // pred_check_branch
        %166 = sbr.rel (%p164) target = $region20
      $region19: #{vn_dgcnn_forward.2} parent=11 // pred_region
        _
      $region20: #{vn_dgcnn_forward.2} parent=11 // pred_fallthru
        _
    $region12: #{vn_dgcnn_forward.2} parent=5 // pred_fallthru
      _
    %p167 = scmp.lt.s32.totalorder %s10, 2
    // Predicated region
    $region21: #{vn_dgcnn_forward.2} parent=5 // pred_check
      %p168 = pneg %p167
    $region22: #{vn_dgcnn_forward.2} parent=5 // pred_check_branch
      %170 = sbr.rel (%p168) target = $region24
    $region23: #{vn_dgcnn_forward.2} parent=5 // pred_region
      // Predicated region
      $region25: #{vn_dgcnn_forward.2} parent=23 // pred_check
        %p171 = pneg %p44
      $region26: #{vn_dgcnn_forward.2} parent=23 // pred_check_branch
        %173 = sbr.rel (%p171) target = $region28
      $region27: #{vn_dgcnn_forward.2} parent=23 // pred_region
        %p174 = scmp.lt.s32.totalorder %s17, 1
        %s175 = scalar_select %p174, %s17, 1
        %p176 = scmp.lt.s32.totalorder %s18, 0
        %s177 = scalar_select %p176, %s18, 0
        %s178 = smul.addr %s177, 3
        %s179 = smul.addr %s175, 3
        %s180 = sadd.s32 %s178, %s179
        %s181 = smul.addr %s180, 4
        %s182 = scalar_lea.vmem %s0, %s181
      $region28: #{vn_dgcnn_forward.2} parent=23 // pred_fallthru
        _
      // Predicated region
      $region29: #{vn_dgcnn_forward.2} parent=23 // pred_check
        %p183 = pneg %p72
      $region30: #{vn_dgcnn_forward.2} parent=23 // pred_check_branch
        %185 = sbr.rel (%p183) target = $region32
      $region31: #{vn_dgcnn_forward.2} parent=23 // pred_region
        %p186 = scmp.lt.s32.totalorder %s17, 1
        %s187 = scalar_select %p186, %s17, 1
        %p188 = scmp.lt.s32.totalorder %s18, 0
        %s189 = scalar_select %p188, %s18, 0
        %s190 = smul.addr %s189, 3
        %s191 = smul.addr %s187, 3
        %s192 = sadd.s32 %s190, %s191
        %s193 = scalar_lea.vmem %s1, %s192
      $region32: #{vn_dgcnn_forward.2} parent=23 // pred_fallthru
        _
    $region24: #{vn_dgcnn_forward.2} parent=5 // pred_fallthru
      _
    %p194 = scmp.le.s32.totalorder 1, %s10
    %p195 = scmp.lt.s32.totalorder %s10, 3
    %p196 = pnand %p194, %p195
    %p197 = pneg %p196
    // Predicated region
    $region33: #{vn_dgcnn_forward.2} parent=5 // pred_check
      _
    $region34: #{vn_dgcnn_forward.2} parent=5 // pred_check_branch
      %199 = sbr.rel (%p196) target = $region36
    $region35: #{vn_dgcnn_forward.2} parent=5 // pred_region
      %s200 = ssub.s32 %s10, 1
      %p201 = scmp.lt.s32.totalorder %s19, 1
      %s202 = scalar_select %p201, %s19, 1
      %p203 = scmp.lt.s32.totalorder %s20, 0
      %s204 = scalar_select %p203, %s20, 0
      %s205 = smul.addr %s204, 3
      %s206 = smul.addr %s202, 3
      %s207 = sadd.s32 %s205, %s206
      %s208 = smul.addr %s207, 4
      %s209 = scalar_lea.vmem %s0, %s208
      %p210 = pneg %p50
      %p211 = pneg %p47
      %p212 = scmp.lt.s32.totalorder %s19, 1
      %s213 = scalar_select %p212, %s19, 1
      %p214 = scmp.lt.s32.totalorder %s20, 0
      %s215 = scalar_select %p214, %s20, 0
      %s216 = smul.addr %s215, 3
      %s217 = smul.addr %s213, 3
      %s218 = sadd.s32 %s216, %s217
      %s219 = scalar_lea.vmem %s1, %s218
      %p220 = pneg %p78
      %p221 = pneg %p75
      %p222 = pneg %p99
      %p223 = pneg %p96
      %p224 = pneg %p120
      %p225 = pneg %p117
      %p226 = pneg %p146
      %p227 = pneg %p143
      %p228 = scmp.lt.s32.totalorder %s19, 1
      %s229 = scalar_select %p228, %s19, 1
      %s230 = smul.addr %s229, 2
      %s231 = smul.addr %s230, 8
      %s232 = scalar_lea.vmem %s4, %s231
      %p233 = scmp.lt.s32.totalorder %s19, 1
      %s234 = scalar_select %p233, %s19, 1
      %p235 = scmp.lt.s32.totalorder %s20, 0
      %s236 = scalar_select %p235, %s20, 0
      %s237 = smul.addr %s236, 3
      %s238 = smul.addr %s234, 3
      %s239 = sadd.s32 %s237, %s238
      %s240 = smul.addr %s239, 4
      %s241 = scalar_lea.vmem %s0, %s240
      %p242 = scmp.lt.s32.totalorder %s19, 1
      %s243 = scalar_select %p242, %s19, 1
      %p244 = scmp.lt.s32.totalorder %s20, 0
      %s245 = scalar_select %p244, %s20, 0
      %s246 = smul.addr %s245, 3
      %s247 = smul.addr %s243, 3
      %s248 = sadd.s32 %s246, %s247
      %s249 = scalar_lea.vmem %s1, %s248
      %p250 = scmp.lt.s32.totalorder %s19, 1
      %s251 = scalar_select %p250, %s19, 1
      %s252 = smul.addr %s251, 2
      %s253 = smul.addr %s252, 8
      %s254 = scalar_lea.vmem %s4, %s253
      %p256 = scmp.eq.s32.totalorder %s20, 0
      // Predicated region
      $region37: #{vn_dgcnn_forward.2} parent=35 // pred_check
        %p257 = pneg %p256
      $region38: #{vn_dgcnn_forward.2} parent=35 // pred_check_branch
        %259 = sbr.rel (%p257) target = $region40
      $region39: #{vn_dgcnn_forward.2} parent=35 // pred_region
        %vm260 = vcmask 7168
        %261 = vst.msk [vmem:[%s254] sm:$0xff] %vm260, 0.0
        %262 = vst.msk [vmem:[%s254 + $0x8] sm:$0xff] %vm260, 0.0
      $region40: #{vn_dgcnn_forward.2} parent=35 // pred_fallthru
        _
      %v263 = vld [vmem:[%s2] sm:$0xf]
      %v264 = vld [vmem:[%s3] sm:$0xf]
      %v265 = vld [vmem:[%s249] sm:$0x7]
      %267 = vst [vmem:[#allocation1] ss:$9 sm:$0xff] %v265
      %v268 = vld [vmem:[#allocation1] sm:$0xff]
      %v269 = vld [vmem:[#allocation1 + $0x9] sm:$0xff]
      %v270 = vld [vmem:[#allocation1 + $0x12] sm:$0xff]
      %vm271 = vcmask 15360
      %v273 = vsel %vm271, %v264, 0
      %vm275 = vcmask 1040384
      %v276 = vsel %vm275, %v268, 0
      %v278 = vsel %vm275, %v269, 0
      %v280 = vsel %vm275, %v270, 0
      %282 = vmatpush.bf16.msra.mxu0 0
      %283 = vmatpush.bf16.msra.mxu0 0
      %284 = vmatpush.bf16.msra.mxu0 0
      %285 = vmatpush.bf16.msra.mxu0 0
      %286 = vmatpush.bf16.msra.mxu0 0
      %287 = vmatpush.bf16.msra.mxu0 0
      %288 = vmatpush.bf16.msra.mxu0 0
      %289 = vmatpush.bf16.msra.mxu0 %v276
      %290 = vmatmul.bf16.gmra.mxu0 %v273
      %v291 = vpop.f32.mrf.mxu0
      %v292 = vadd.f32 0.0, %v291
      %v293 = vpop.f32.mrf.mxu0
      %294 = vdwg.mxu0
      %295 = vmatpush.bf16.msra.mxu0 0
      %296 = vmatpush.bf16.msra.mxu0 0
      %297 = vmatpush.bf16.msra.mxu0 0
      %298 = vmatpush.bf16.msra.mxu0 0
      %299 = vmatpush.bf16.msra.mxu0 0
      %300 = vmatpush.bf16.msra.mxu0 0
      %301 = vmatpush.bf16.msra.mxu0 0
      %302 = vmatpush.bf16.msra.mxu0 %v278
      %303 = vmatmul.bf16.gmra.mxu0 %v273
      %v304 = vpop.f32.mrf.mxu0
      %v305 = vadd.f32 0.0, %v304
      %v306 = vpop.f32.mrf.mxu0
      %307 = vdwg.mxu0
      %308 = vmatpush.bf16.msra.mxu0 0
      %309 = vmatpush.bf16.msra.mxu0 0
      %310 = vmatpush.bf16.msra.mxu0 0
      %311 = vmatpush.bf16.msra.mxu0 0
      %312 = vmatpush.bf16.msra.mxu0 0
      %313 = vmatpush.bf16.msra.mxu0 0
      %314 = vmatpush.bf16.msra.mxu0 0
      %315 = vmatpush.bf16.msra.mxu0 %v280
      %316 = vmatmul.bf16.gmra.mxu0 %v273
      %v317 = vpop.f32.mrf.mxu0
      %v318 = vadd.f32 0.0, %v317
      %v319 = vpop.f32.mrf.mxu0
      %320 = vdwg.mxu0
      %v321 = vld [vmem:[%s241] sm:$0x11]
      %v322 = vld [vmem:[%s241 + $0x8] sm:$0x1]
      %v325 = vunpack.c.l.b16 %v321
      %v326 = vunpack.c.h.b16 %v321
      %v327 = vunpack.c.l.b16 %v322
      %v328 = vpack.c.b16 %v325, %v325
      %v329 = vpack.c.b16 %v326, %v326
      %v330 = vpack.c.b16 %v327, %v327
      %v332 = vsel %vm271, %v263, 0
      %v335 = vsel %vm275, %v328, 0
      %v338 = vsel %vm275, %v329, 0
      %v341 = vsel %vm275, %v330, 0
      %343 = vmatpush.bf16.msra.mxu0 0
      %344 = vmatpush.bf16.msra.mxu0 0
      %345 = vmatpush.bf16.msra.mxu0 0
      %346 = vmatpush.bf16.msra.mxu0 0
      %347 = vmatpush.bf16.msra.mxu0 0
      %348 = vmatpush.bf16.msra.mxu0 0
      %349 = vmatpush.bf16.msra.mxu0 0
      %350 = vmatpush.bf16.msra.mxu0 %v335
      %351 = vmatmul.bf16.gmra.mxu0 %v332
      %v352 = vpop.f32.mrf.mxu0
      %v353 = vadd.f32 %v292, %v352
      %v354 = vpop.f32.mrf.mxu0
      %355 = vdwg.mxu0
      %356 = vmatpush.bf16.msra.mxu0 0
      %357 = vmatpush.bf16.msra.mxu0 0
      %358 = vmatpush.bf16.msra.mxu0 0
      %359 = vmatpush.bf16.msra.mxu0 0
      %360 = vmatpush.bf16.msra.mxu0 0
      %361 = vmatpush.bf16.msra.mxu0 0
      %362 = vmatpush.bf16.msra.mxu0 0
      %363 = vmatpush.bf16.msra.mxu0 %v338
      %364 = vmatmul.bf16.gmra.mxu0 %v332
      %v365 = vpop.f32.mrf.mxu0
      %v366 = vadd.f32 %v305, %v365
      %v367 = vpop.f32.mrf.mxu0
      %368 = vdwg.mxu0
      %369 = vmatpush.bf16.msra.mxu0 0
      %370 = vmatpush.bf16.msra.mxu0 0
      %371 = vmatpush.bf16.msra.mxu0 0
      %372 = vmatpush.bf16.msra.mxu0 0
      %373 = vmatpush.bf16.msra.mxu0 0
      %374 = vmatpush.bf16.msra.mxu0 0
      %375 = vmatpush.bf16.msra.mxu0 0
      %376 = vmatpush.bf16.msra.mxu0 %v341
      %377 = vmatmul.bf16.gmra.mxu0 %v332
      %v378 = vpop.f32.mrf.mxu0
      %v379 = vadd.f32 %v318, %v378
      %v380 = vpop.f32.mrf.mxu0
      %381 = vdwg.mxu0
      %v382 = vmul.f32 %v353, %v353
      %v383 = vmul.f32 %v366, %v366
      %v384 = vadd.f32 %v382, %v383
      %v385 = vmul.f32 %v379, %v379
      %v386 = vadd.f32 %v384, %v385
      %v387 = vrsqrt.pop %v386
      %v388 = vmul.f32 %v387, %v386
      %v389 = vmul.f32 %v388, %v387
      %v390 = vmul.f32 0.5, %v389
      %v391 = vsub.f32 1.5, %v390
      %v392 = vmul.f32 %v387, %v391
      %v393 = vmul.f32 %v386, %v392
      %vm394 = vcmp.eq.f32.partialorder %v386, inf
      %v395 = vsel %vm394, %v386, %v393
      %vm396 = vcmp.eq.f32.partialorder %v386, 0.0
      %v397 = vand.u32 %v386, 2147483648
      %v398 = vsel %vm396, %v397, %v395
      %v399 = vadd.f32 %v398, 1e-06
      %v400 = vadd.f32 %v399, 0.0
      %v401 = vmul.f32 %v399, %v399
      %v402 = vadd.f32 %v401, 0.0
      %v403 = vld [vmem:[%s241] sm:$0x22]
      %v404 = vld [vmem:[%s241 + $0x8] sm:$0x2]
      %v407 = vunpack.c.l.b16 %v403
      %v408 = vunpack.c.h.b16 %v403
      %v409 = vunpack.c.l.b16 %v404
      %v410 = vpack.c.b16 %v407, %v407
      %v411 = vpack.c.b16 %v408, %v408
      %v412 = vpack.c.b16 %v409, %v409
      %v413 = vrot.slane %v410, 1
      %v414 = vrot.slane %v411, 1
      %v415 = vrot.slane %v412, 1
      %v417 = vsel %vm275, %v413, 0
      %v420 = vsel %vm275, %v414, 0
      %v423 = vsel %vm275, %v415, 0
      %425 = vmatpush.bf16.msra.mxu0 0
      %426 = vmatpush.bf16.msra.mxu0 0
      %427 = vmatpush.bf16.msra.mxu0 0
      %428 = vmatpush.bf16.msra.mxu0 0
      %429 = vmatpush.bf16.msra.mxu0 0
      %430 = vmatpush.bf16.msra.mxu0 0
      %431 = vmatpush.bf16.msra.mxu0 0
      %432 = vmatpush.bf16.msra.mxu0 %v417
      %433 = vmatmul.bf16.gmra.mxu0 %v332
      %v434 = vpop.f32.mrf.mxu0
      %v435 = vadd.f32 %v292, %v434
      %v436 = vpop.f32.mrf.mxu0
      %437 = vdwg.mxu0
      %438 = vmatpush.bf16.msra.mxu0 0
      %439 = vmatpush.bf16.msra.mxu0 0
      %440 = vmatpush.bf16.msra.mxu0 0
      %441 = vmatpush.bf16.msra.mxu0 0
      %442 = vmatpush.bf16.msra.mxu0 0
      %443 = vmatpush.bf16.msra.mxu0 0
      %444 = vmatpush.bf16.msra.mxu0 0
      %445 = vmatpush.bf16.msra.mxu0 %v420
      %446 = vmatmul.bf16.gmra.mxu0 %v332
      %v447 = vpop.f32.mrf.mxu0
      %v448 = vadd.f32 %v305, %v447
      %v449 = vpop.f32.mrf.mxu0
      %450 = vdwg.mxu0
      %451 = vmatpush.bf16.msra.mxu0 0
      %452 = vmatpush.bf16.msra.mxu0 0
      %453 = vmatpush.bf16.msra.mxu0 0
      %454 = vmatpush.bf16.msra.mxu0 0
      %455 = vmatpush.bf16.msra.mxu0 0
      %456 = vmatpush.bf16.msra.mxu0 0
      %457 = vmatpush.bf16.msra.mxu0 0
      %458 = vmatpush.bf16.msra.mxu0 %v423
      %459 = vmatmul.bf16.gmra.mxu0 %v332
      %v460 = vpop.f32.mrf.mxu0
      %v461 = vadd.f32 %v318, %v460
      %v462 = vpop.f32.mrf.mxu0
      %463 = vdwg.mxu0
      %v464 = vmul.f32 %v435, %v435
      %v465 = vmul.f32 %v448, %v448
      %v466 = vadd.f32 %v464, %v465
      %v467 = vmul.f32 %v461, %v461
      %v468 = vadd.f32 %v466, %v467
      %v469 = vrsqrt.pop %v468
      %v470 = vmul.f32 %v469, %v468
      %v471 = vmul.f32 %v470, %v469
      %v472 = vmul.f32 0.5, %v471
      %v473 = vsub.f32 1.5, %v472
      %v474 = vmul.f32 %v469, %v473
      %v475 = vmul.f32 %v468, %v474
      %vm476 = vcmp.eq.f32.partialorder %v468, inf
      %v477 = vsel %vm476, %v468, %v475
      %vm478 = vcmp.eq.f32.partialorder %v468, 0.0
      %v479 = vand.u32 %v468, 2147483648
      %v480 = vsel %vm478, %v479, %v477
      %v481 = vadd.f32 %v480, 1e-06
      %v482 = vadd.f32 %v400, %v481
      %v483 = vmul.f32 %v481, %v481
      %v484 = vadd.f32 %v402, %v483
      %v485 = vld [vmem:[%s241] sm:$0x44]
      %v486 = vld [vmem:[%s241 + $0x8] sm:$0x4]
      %v489 = vunpack.c.l.b16 %v485
      %v490 = vunpack.c.h.b16 %v485
      %v491 = vunpack.c.l.b16 %v486
      %v492 = vpack.c.b16 %v489, %v489
      %v493 = vpack.c.b16 %v490, %v490
      %v494 = vpack.c.b16 %v491, %v491
      %v495 = vrot.slane %v492, 2
      %v496 = vrot.slane %v493, 2
      %v497 = vrot.slane %v494, 2
      %v499 = vsel %vm275, %v495, 0
      %v502 = vsel %vm275, %v496, 0
      %v505 = vsel %vm275, %v497, 0
      %507 = vmatpush.bf16.msra.mxu0 0
      %508 = vmatpush.bf16.msra.mxu0 0
      %509 = vmatpush.bf16.msra.mxu0 0
      %510 = vmatpush.bf16.msra.mxu0 0
      %511 = vmatpush.bf16.msra.mxu0 0
      %512 = vmatpush.bf16.msra.mxu0 0
      %513 = vmatpush.bf16.msra.mxu0 0
      %514 = vmatpush.bf16.msra.mxu0 %v499
      %515 = vmatmul.bf16.gmra.mxu0 %v332
      %v516 = vpop.f32.mrf.mxu0
      %v517 = vadd.f32 %v292, %v516
      %v518 = vpop.f32.mrf.mxu0
      %519 = vdwg.mxu0
      %520 = vmatpush.bf16.msra.mxu0 0
      %521 = vmatpush.bf16.msra.mxu0 0
      %522 = vmatpush.bf16.msra.mxu0 0
      %523 = vmatpush.bf16.msra.mxu0 0
      %524 = vmatpush.bf16.msra.mxu0 0
      %525 = vmatpush.bf16.msra.mxu0 0
      %526 = vmatpush.bf16.msra.mxu0 0
      %527 = vmatpush.bf16.msra.mxu0 %v502
      %528 = vmatmul.bf16.gmra.mxu0 %v332
      %v529 = vpop.f32.mrf.mxu0
      %v530 = vadd.f32 %v305, %v529
      %v531 = vpop.f32.mrf.mxu0
      %532 = vdwg.mxu0
      %533 = vmatpush.bf16.msra.mxu0 0
      %534 = vmatpush.bf16.msra.mxu0 0
      %535 = vmatpush.bf16.msra.mxu0 0
      %536 = vmatpush.bf16.msra.mxu0 0
      %537 = vmatpush.bf16.msra.mxu0 0
      %538 = vmatpush.bf16.msra.mxu0 0
      %539 = vmatpush.bf16.msra.mxu0 0
      %540 = vmatpush.bf16.msra.mxu0 %v505
      %541 = vmatmul.bf16.gmra.mxu0 %v332
      %v542 = vpop.f32.mrf.mxu0
      %v543 = vadd.f32 %v318, %v542
      %v544 = vpop.f32.mrf.mxu0
      %545 = vdwg.mxu0
      %v546 = vmul.f32 %v517, %v517
      %v547 = vmul.f32 %v530, %v530
      %v548 = vadd.f32 %v546, %v547
      %v549 = vmul.f32 %v543, %v543
      %v550 = vadd.f32 %v548, %v549
      %v551 = vrsqrt.pop %v550
      %v552 = vmul.f32 %v551, %v550
      %v553 = vmul.f32 %v552, %v551
      %v554 = vmul.f32 0.5, %v553
      %v555 = vsub.f32 1.5, %v554
      %v556 = vmul.f32 %v551, %v555
      %v557 = vmul.f32 %v550, %v556
      %vm558 = vcmp.eq.f32.partialorder %v550, inf
      %v559 = vsel %vm558, %v550, %v557
      %vm560 = vcmp.eq.f32.partialorder %v550, 0.0
      %v561 = vand.u32 %v550, 2147483648
      %v562 = vsel %vm560, %v561, %v559
      %v563 = vadd.f32 %v562, 1e-06
      %v564 = vadd.f32 %v482, %v563
      %v565 = vmul.f32 %v563, %v563
      %v566 = vadd.f32 %v484, %v565
      %v567 = vld [vmem:[%s241] sm:$0x88]
      %v568 = vld [vmem:[%s241 + $0x8] sm:$0x8]
      %v571 = vunpack.c.l.b16 %v567
      %v572 = vunpack.c.h.b16 %v567
      %v573 = vunpack.c.l.b16 %v568
      %v574 = vpack.c.b16 %v571, %v571
      %v575 = vpack.c.b16 %v572, %v572
      %v576 = vpack.c.b16 %v573, %v573
      %v577 = vrot.slane %v574, 3
      %v578 = vrot.slane %v575, 3
      %v579 = vrot.slane %v576, 3
      %v581 = vsel %vm275, %v577, 0
      %v584 = vsel %vm275, %v578, 0
      %v587 = vsel %vm275, %v579, 0
      %589 = vmatpush.bf16.msra.mxu0 0
      %590 = vmatpush.bf16.msra.mxu0 0
      %591 = vmatpush.bf16.msra.mxu0 0
      %592 = vmatpush.bf16.msra.mxu0 0
      %593 = vmatpush.bf16.msra.mxu0 0
      %594 = vmatpush.bf16.msra.mxu0 0
      %595 = vmatpush.bf16.msra.mxu0 0
      %596 = vmatpush.bf16.msra.mxu0 %v581
      %597 = vmatmul.bf16.gmra.mxu0 %v332
      %v598 = vpop.f32.mrf.mxu0
      %v599 = vadd.f32 %v292, %v598
      %v600 = vpop.f32.mrf.mxu0
      %601 = vdwg.mxu0
      %602 = vmatpush.bf16.msra.mxu0 0
      %603 = vmatpush.bf16.msra.mxu0 0
      %604 = vmatpush.bf16.msra.mxu0 0
      %605 = vmatpush.bf16.msra.mxu0 0
      %606 = vmatpush.bf16.msra.mxu0 0
      %607 = vmatpush.bf16.msra.mxu0 0
      %608 = vmatpush.bf16.msra.mxu0 0
      %609 = vmatpush.bf16.msra.mxu0 %v584
      %610 = vmatmul.bf16.gmra.mxu0 %v332
      %v611 = vpop.f32.mrf.mxu0
      %v612 = vadd.f32 %v305, %v611
      %v613 = vpop.f32.mrf.mxu0
      %614 = vdwg.mxu0
      %615 = vmatpush.bf16.msra.mxu0 0
      %616 = vmatpush.bf16.msra.mxu0 0
      %617 = vmatpush.bf16.msra.mxu0 0
      %618 = vmatpush.bf16.msra.mxu0 0
      %619 = vmatpush.bf16.msra.mxu0 0
      %620 = vmatpush.bf16.msra.mxu0 0
      %621 = vmatpush.bf16.msra.mxu0 0
      %622 = vmatpush.bf16.msra.mxu0 %v587
      %623 = vmatmul.bf16.gmra.mxu0 %v332
      %v624 = vpop.f32.mrf.mxu0
      %v625 = vadd.f32 %v318, %v624
      %v626 = vpop.f32.mrf.mxu0
      %627 = vdwg.mxu0
      %v628 = vmul.f32 %v599, %v599
      %v629 = vmul.f32 %v612, %v612
      %v630 = vadd.f32 %v628, %v629
      %v631 = vmul.f32 %v625, %v625
      %v632 = vadd.f32 %v630, %v631
      %v633 = vrsqrt.pop %v632
      %v634 = vmul.f32 %v633, %v632
      %v635 = vmul.f32 %v634, %v633
      %v636 = vmul.f32 0.5, %v635
      %v637 = vsub.f32 1.5, %v636
      %v638 = vmul.f32 %v633, %v637
      %v639 = vmul.f32 %v632, %v638
      %vm640 = vcmp.eq.f32.partialorder %v632, inf
      %v641 = vsel %vm640, %v632, %v639
      %vm642 = vcmp.eq.f32.partialorder %v632, 0.0
      %v643 = vand.u32 %v632, 2147483648
      %v644 = vsel %vm642, %v643, %v641
      %v645 = vadd.f32 %v644, 1e-06
      %v646 = vadd.f32 %v564, %v645
      %v647 = vmul.f32 %v645, %v645
      %v648 = vadd.f32 %v566, %v647
      %v649 = vlaneseq
      %v650 = vand.u32 %v649, 127
      %s651 = smul.u32 %s20, 128
      %v652 = vstv %s651
      %v653 = vadd.s32 %v650, %v652
      %vm654 = vcmp.lt.s32.totalorder %v653, 16
      %v655 = vsel %vm654, 1, 0
      %vm656 = vcmp.eq.s32.totalorder %v655, 1
      %v657 = vsel %vm656, %v646, 0.0
      %v658 = vsel %vm656, %v648, 0.0
      %v659 = vld [vmem:[%s254] sm:$0xff]
      %v660 = vld [vmem:[%s254 + $0x8] sm:$0xff]
      %661 = vadd.xlane.f32.xlu0 %v657
      %v662 = vpop.xlane.xlu0 %661
      %663 = vadd.xlane.f32.xlu0 %v658
      %v664 = vpop.xlane.xlu0 %663
      %v665 = vadd.f32 %v659, %v662
      %v666 = vadd.f32 %v660, %v664
      %vm667 = vcmask 7168
      %668 = vst.msk [vmem:[%s254] sm:$0xff] %vm667, %v665
      %669 = vst.msk [vmem:[%s254 + $0x8] sm:$0xff] %vm667, %v666
      %p670 = scmp.lt.s32.totalorder %s19, 1
      %s671 = scalar_select %p670, %s19, 1
      %s672 = smul.addr %s671, 2
      %s673 = smul.addr %s672, 8
      %s674 = scalar_lea.vmem %s4, %s673
      // Predicated region
      $region41: #{vn_dgcnn_forward.2} parent=35 // pred_check
        %p675 = pneg %p143
      $region42: #{vn_dgcnn_forward.2} parent=35 // pred_check_branch
        %677 = sbr.rel (%p675) target = $region44
      $region43: #{vn_dgcnn_forward.2} parent=35 // pred_region
        _
      $region44: #{vn_dgcnn_forward.2} parent=35 // pred_fallthru
        _
    $region36: #{vn_dgcnn_forward.2} parent=5 // pred_fallthru
      _
    %p678 = scmp.le.s32.totalorder 2, %s10
    // Predicated region
    $region45: #{vn_dgcnn_forward.2} parent=5 // pred_check
      %p679 = pneg %p678
    $region46: #{vn_dgcnn_forward.2} parent=5 // pred_check_branch
      %681 = sbr.rel (%p679) target = $region48
    $region47: #{vn_dgcnn_forward.2} parent=5 // pred_region
      %s682 = ssub.s32 %s10, 2
      // Predicated region
      $region49: #{vn_dgcnn_forward.2} parent=47 // pred_check
        %p683 = pneg %p149
      $region50: #{vn_dgcnn_forward.2} parent=47 // pred_check_branch
        %685 = sbr.rel (%p683) target = $region52
      $region51: #{vn_dgcnn_forward.2} parent=47 // pred_region
        %p686 = scmp.lt.s32.totalorder %s21, 1
        %s687 = scalar_select %p686, %s21, 1
        %s688 = smul.addr %s687, 2
        %s689 = smul.addr %s688, 8
        %s690 = scalar_lea.vmem %s4, %s689
      $region52: #{vn_dgcnn_forward.2} parent=47 // pred_fallthru
        _
    $region48: #{vn_dgcnn_forward.2} parent=5 // pred_fallthru
      _
  $region6: #{vn_dgcnn_forward.2} parent=0 // loop_footer
    %s14 = sadd.s32 1, %s10
  $region7: #{vn_dgcnn_forward.2} parent=0 // loop_footer_branch
    %9 = sbr.rel target = $region3
  $region8: #{vn_dgcnn_forward.2} parent=0 // loop_exit
    _

// kernel: vn_dgcnn_forward.3
$region0: #{vn_dgcnn_forward.3}
  #allocation0 [shape = 'u32[]', space=smem, size = 0x4, offset = 0x4, fixed_abs, tag = 'smem constant byte address 0x4 - core index']
  #allocation1 [shape = 'u32[72,128]{1,0:T(1,128)}', space=vmem, size = 0x9000, scoped, tag = 'internal scratch']
  #allocation2 [shape = 'f32[8,384]{1,0:T(8,128)}', space=vmem, size = 0x3000, scoped, tag = 'scratch operand']
  %s0 = inlined_call_operand.vmem [shape: bf16[2,1,8,384], index: 0, kind: input, shape index: {}]
  %s1 = inlined_call_operand.vmem [shape: bf16[2,1,2,384], index: 1, kind: input, shape index: {}]
  %s2 = inlined_call_operand.vmem [shape: bf16[16,2], index: 2, kind: input, shape index: {}]
  %s3 = inlined_call_operand.vmem [shape: bf16[16,2], index: 3, kind: input, shape index: {}]
  %s4 = inlined_call_operand.vmem [shape: f32[8,1], index: 4, kind: input, shape index: {}]
  %s5 = inlined_call_operand.vmem [shape: f32[8,1], index: 5, kind: input, shape index: {}]
  %s6 = inlined_call_operand.vmem [shape: f32[2,3,8,128], index: 6, kind: output, shape index: {}]
  %s7 = sld [smem:[#allocation0]]
  $region57: #{vn_dgcnn_forward.3} parent=0
    _
  %s9 = ssub.s32 1, %s7
  %s10 = scalar_select 0, %s9, %s7
  loop: start=0, step=1, limit=4
  $region2: #{vn_dgcnn_forward.3} parent=0 // loop_pre_header
    _
  $region3: #{vn_dgcnn_forward.3} parent=0 // loop_header
    %s12 = sphi 0, %s16
    %p13 = scmp.ge.s32.totalorder %s12, 4
    %s19 = sphi 0, %s31
    %s20 = sphi 0, %s27
    %s21 = sphi 0, %s19
    %s22 = sphi 0, %s20
    %s23 = sphi 0, %s21
    %s24 = sphi 0, %s22
    %s36 = sphi 0, %s38
    %s39 = sphi 0, %s36
    %s40 = sphi 0, %s39
    %s56 = sphi 0, %s40
    %s64 = sphi 0, %s66
    %s67 = sphi 0, %s64
    %s68 = sphi 0, %s67
    %s84 = sphi 0, %s68
    %s88 = sphi 0, %s88
    %s90 = sphi 0, %s88
    %s91 = sphi 0, %s90
    %s105 = sphi 0, %s91
    %s109 = sphi 0, %s109
    %s111 = sphi 0, %s109
    %s112 = sphi 0, %s111
    %s126 = sphi 0, %s112
    %s130 = sphi 0, %s130
    %s132 = sphi 0, %s130
    %s133 = sphi 0, %s132
    %s147 = sphi 0, %s133
    %s151 = sphi 0, %s151
    %s153 = sphi 0, %s151
    %s154 = sphi 0, %s153
    %s168 = sphi 0, %s154
    %s176 = sphi 0, %s178
    %s179 = sphi 0, %s176
    %s180 = sphi 0, %s179
    %s196 = sphi 0, %s180
  $region4: #{vn_dgcnn_forward.3} parent=0 // loop_header_branch
    %15 = sbr.rel (%p13) target = $region8
  $region5: #{vn_dgcnn_forward.3} parent=0 // loop_body
    %s17 = ssub.s32 %s12, 1
    %s18 = ssub.s32 %s12, 2
    %s25 = sadd.s32 1, %s20
    %p26 = scmp.ge.s32.totalorder %s25, 1
    %s27 = scalar_select %p26, 0, %s25
    %s28 = sadd.s32 1, %s19
    %s29 = scalar_select %p26, %s28, %s19
    %p30 = scmp.ge.s32.totalorder %s29, 2
    %s31 = scalar_select %p30, 0, %s29
    %s32 = ssub.s32 %s19, %s31
    %s33 = ssub.s32 %s20, %s27
    %s34 = sor.u32 %s32, %s33
    %p35 = scmp.eq.s32.totalorder %s34, 0
    %s37 = sadd.s32 %s36, 1
    %s38 = scalar_select %p35, %s36, %s37
    %p41 = pneg %p35
    %p42 = scmp.eq.s32.totalorder %s12, 1
    %p43 = por %p41, %p42
    %p44 = scmp.ne.s32.totalorder %s36, %s39
    %p45 = scmp.eq.s32.totalorder %s12, 0
    %p46 = por %p44, %p45
    %p47 = scmp.ne.s32.totalorder %s36, %s39
    %p48 = scmp.eq.s32.totalorder %s17, 1
    %p49 = por %p47, %p48
    %p50 = scmp.ne.s32.totalorder %s39, %s40
    %p51 = scmp.eq.s32.totalorder %s17, 0
    %p52 = por %p50, %p51
    %p53 = scmp.ne.s32.totalorder %s39, %s40
    %p54 = scmp.eq.s32.totalorder %s18, 1
    %p55 = por %p53, %p54
    %p57 = scmp.ne.s32.totalorder %s40, %s56
    %p58 = scmp.eq.s32.totalorder %s18, 0
    %p59 = por %p57, %p58
    %s60 = ssub.s32 %s19, %s31
    %s61 = ssub.s32 %s20, %s27
    %s62 = sor.u32 %s60, %s61
    %p63 = scmp.eq.s32.totalorder %s62, 0
    %s65 = sadd.s32 %s64, 1
    %s66 = scalar_select %p63, %s64, %s65
    %p69 = pneg %p63
    %p70 = scmp.eq.s32.totalorder %s12, 1
    %p71 = por %p69, %p70
    %p72 = scmp.ne.s32.totalorder %s64, %s67
    %p73 = scmp.eq.s32.totalorder %s12, 0
    %p74 = por %p72, %p73
    %p75 = scmp.ne.s32.totalorder %s64, %s67
    %p76 = scmp.eq.s32.totalorder %s17, 1
    %p77 = por %p75, %p76
    %p78 = scmp.ne.s32.totalorder %s67, %s68
    %p79 = scmp.eq.s32.totalorder %s17, 0
    %p80 = por %p78, %p79
    %p81 = scmp.ne.s32.totalorder %s67, %s68
    %p82 = scmp.eq.s32.totalorder %s18, 1
    %p83 = por %p81, %p82
    %p85 = scmp.ne.s32.totalorder %s68, %s84
    %p86 = scmp.eq.s32.totalorder %s18, 0
    %p87 = por %p85, %p86
    %s89 = sadd.s32 %s88, 1
    %p92 = scmp.eq.s32.totalorder %s12, 1
    %p93 = scmp.ne.s32.totalorder %s88, %s90
    %p94 = scmp.eq.s32.totalorder %s12, 0
    %p95 = por %p93, %p94
    %p96 = scmp.ne.s32.totalorder %s88, %s90
    %p97 = scmp.eq.s32.totalorder %s17, 1
    %p98 = por %p96, %p97
    %p99 = scmp.ne.s32.totalorder %s90, %s91
    %p100 = scmp.eq.s32.totalorder %s17, 0
    %p101 = por %p99, %p100
    %p102 = scmp.ne.s32.totalorder %s90, %s91
    %p103 = scmp.eq.s32.totalorder %s18, 1
    %p104 = por %p102, %p103
    %p106 = scmp.ne.s32.totalorder %s91, %s105
    %p107 = scmp.eq.s32.totalorder %s18, 0
    %p108 = por %p106, %p107
    %s110 = sadd.s32 %s109, 1
    %p113 = scmp.eq.s32.totalorder %s12, 1
    %p114 = scmp.ne.s32.totalorder %s109, %s111
    %p115 = scmp.eq.s32.totalorder %s12, 0
    %p116 = por %p114, %p115
    %p117 = scmp.ne.s32.totalorder %s109, %s111
    %p118 = scmp.eq.s32.totalorder %s17, 1
    %p119 = por %p117, %p118
    %p120 = scmp.ne.s32.totalorder %s111, %s112
    %p121 = scmp.eq.s32.totalorder %s17, 0
    %p122 = por %p120, %p121
    %p123 = scmp.ne.s32.totalorder %s111, %s112
    %p124 = scmp.eq.s32.totalorder %s18, 1
    %p125 = por %p123, %p124
    %p127 = scmp.ne.s32.totalorder %s112, %s126
    %p128 = scmp.eq.s32.totalorder %s18, 0
    %p129 = por %p127, %p128
    %s131 = sadd.s32 %s130, 1
    %p134 = scmp.eq.s32.totalorder %s12, 1
    %p135 = scmp.ne.s32.totalorder %s130, %s132
    %p136 = scmp.eq.s32.totalorder %s12, 0
    %p137 = por %p135, %p136
    %p138 = scmp.ne.s32.totalorder %s130, %s132
    %p139 = scmp.eq.s32.totalorder %s17, 1
    %p140 = por %p138, %p139
    %p141 = scmp.ne.s32.totalorder %s132, %s133
    %p142 = scmp.eq.s32.totalorder %s17, 0
    %p143 = por %p141, %p142
    %p144 = scmp.ne.s32.totalorder %s132, %s133
    %p145 = scmp.eq.s32.totalorder %s18, 1
    %p146 = por %p144, %p145
    %p148 = scmp.ne.s32.totalorder %s133, %s147
    %p149 = scmp.eq.s32.totalorder %s18, 0
    %p150 = por %p148, %p149
    %s152 = sadd.s32 %s151, 1
    %p155 = scmp.eq.s32.totalorder %s12, 1
    %p156 = scmp.ne.s32.totalorder %s151, %s153
    %p157 = scmp.eq.s32.totalorder %s12, 0
    %p158 = por %p156, %p157
    %p159 = scmp.ne.s32.totalorder %s151, %s153
    %p160 = scmp.eq.s32.totalorder %s17, 1
    %p161 = por %p159, %p160
    %p162 = scmp.ne.s32.totalorder %s153, %s154
    %p163 = scmp.eq.s32.totalorder %s17, 0
    %p164 = por %p162, %p163
    %p165 = scmp.ne.s32.totalorder %s153, %s154
    %p166 = scmp.eq.s32.totalorder %s18, 1
    %p167 = por %p165, %p166
    %p169 = scmp.ne.s32.totalorder %s154, %s168
    %p170 = scmp.eq.s32.totalorder %s18, 0
    %p171 = por %p169, %p170
    %s172 = ssub.s32 %s19, %s31
    %s173 = ssub.s32 %s20, %s27
    %s174 = sor.u32 %s172, %s173
    %p175 = scmp.eq.s32.totalorder %s174, 0
    %s177 = sadd.s32 %s176, 1
    %s178 = scalar_select %p175, %s176, %s177
    %p181 = pneg %p175
    %p182 = scmp.eq.s32.totalorder %s12, 1
    %p183 = por %p181, %p182
    %p184 = scmp.ne.s32.totalorder %s176, %s179
    %p185 = scmp.eq.s32.totalorder %s12, 0
    %p186 = por %p184, %p185
    %p187 = scmp.ne.s32.totalorder %s176, %s179
    %p188 = scmp.eq.s32.totalorder %s17, 1
    %p189 = por %p187, %p188
    %p190 = scmp.ne.s32.totalorder %s179, %s180
    %p191 = scmp.eq.s32.totalorder %s17, 0
    %p192 = por %p190, %p191
    %p193 = scmp.ne.s32.totalorder %s179, %s180
    %p194 = scmp.eq.s32.totalorder %s18, 1
    %p195 = por %p193, %p194
    %p197 = scmp.ne.s32.totalorder %s180, %s196
    %p198 = scmp.eq.s32.totalorder %s18, 0
    %p199 = por %p197, %p198
    %p200 = scmp.le.s32.totalorder 1, %s12
    %p201 = scmp.lt.s32.totalorder %s12, 3
    %p202 = pnand %p200, %p201
    %p203 = pneg %p202
    // Predicated region
    $region9: #{vn_dgcnn_forward.3} parent=5 // pred_check
      _
    $region10: #{vn_dgcnn_forward.3} parent=5 // pred_check_branch
      %205 = sbr.rel (%p202) target = $region12
    $region11: #{vn_dgcnn_forward.3} parent=5 // pred_region
      %s206 = ssub.s32 %s12, 1
      // Predicated region
      $region13: #{vn_dgcnn_forward.3} parent=11 // pred_check
        %p207 = pneg %p101
      $region14: #{vn_dgcnn_forward.3} parent=11 // pred_check_branch
        %209 = sbr.rel (%p207) target = $region16
      $region15: #{vn_dgcnn_forward.3} parent=11 // pred_region
        _
      $region16: #{vn_dgcnn_forward.3} parent=11 // pred_fallthru
        _
      // Predicated region
      $region17: #{vn_dgcnn_forward.3} parent=11 // pred_check
        %p210 = pneg %p122
      $region18: #{vn_dgcnn_forward.3} parent=11 // pred_check_branch
        %212 = sbr.rel (%p210) target = $region20
      $region19: #{vn_dgcnn_forward.3} parent=11 // pred_region
        _
      $region20: #{vn_dgcnn_forward.3} parent=11 // pred_fallthru
        _
      // Predicated region
      $region21: #{vn_dgcnn_forward.3} parent=11 // pred_check
        %p213 = pneg %p143
      $region22: #{vn_dgcnn_forward.3} parent=11 // pred_check_branch
        %215 = sbr.rel (%p213) target = $region24
      $region23: #{vn_dgcnn_forward.3} parent=11 // pred_region
        _
      $region24: #{vn_dgcnn_forward.3} parent=11 // pred_fallthru
        _
      // Predicated region
      $region25: #{vn_dgcnn_forward.3} parent=11 // pred_check
        %p216 = pneg %p164
      $region26: #{vn_dgcnn_forward.3} parent=11 // pred_check_branch
        %218 = sbr.rel (%p216) target = $region28
      $region27: #{vn_dgcnn_forward.3} parent=11 // pred_region
        _
      $region28: #{vn_dgcnn_forward.3} parent=11 // pred_fallthru
        _
    $region12: #{vn_dgcnn_forward.3} parent=5 // pred_fallthru
      _
    %p219 = scmp.lt.s32.totalorder %s12, 2
    // Predicated region
    $region29: #{vn_dgcnn_forward.3} parent=5 // pred_check
      %p220 = pneg %p219
    $region30: #{vn_dgcnn_forward.3} parent=5 // pred_check_branch
      %222 = sbr.rel (%p220) target = $region32
    $region31: #{vn_dgcnn_forward.3} parent=5 // pred_region
      // Predicated region
      $region33: #{vn_dgcnn_forward.3} parent=31 // pred_check
        %p223 = pneg %p46
      $region34: #{vn_dgcnn_forward.3} parent=31 // pred_check_branch
        %225 = sbr.rel (%p223) target = $region36
      $region35: #{vn_dgcnn_forward.3} parent=31 // pred_region
        %p226 = scmp.lt.s32.totalorder %s19, 1
        %s227 = scalar_select %p226, %s19, 1
        %p228 = scmp.lt.s32.totalorder %s20, 0
        %s229 = scalar_select %p228, %s20, 0
        %s230 = smul.addr %s229, 3
        %s231 = smul.addr %s227, 3
        %s232 = sadd.s32 %s230, %s231
        %s233 = smul.addr %s232, 4
        %s234 = scalar_lea.vmem %s0, %s233
      $region36: #{vn_dgcnn_forward.3} parent=31 // pred_fallthru
        _
      // Predicated region
      $region37: #{vn_dgcnn_forward.3} parent=31 // pred_check
        %p235 = pneg %p74
      $region38: #{vn_dgcnn_forward.3} parent=31 // pred_check_branch
        %237 = sbr.rel (%p235) target = $region40
      $region39: #{vn_dgcnn_forward.3} parent=31 // pred_region
        %p238 = scmp.lt.s32.totalorder %s19, 1
        %s239 = scalar_select %p238, %s19, 1
        %p240 = scmp.lt.s32.totalorder %s20, 0
        %s241 = scalar_select %p240, %s20, 0
        %s242 = smul.addr %s241, 3
        %s243 = smul.addr %s239, 3
        %s244 = sadd.s32 %s242, %s243
        %s245 = scalar_lea.vmem %s1, %s244
      $region40: #{vn_dgcnn_forward.3} parent=31 // pred_fallthru
        _
    $region32: #{vn_dgcnn_forward.3} parent=5 // pred_fallthru
      _
    %p246 = scmp.le.s32.totalorder 1, %s12
    %p247 = scmp.lt.s32.totalorder %s12, 3
    %p248 = pnand %p246, %p247
    %p249 = pneg %p248
    // Predicated region
    $region41: #{vn_dgcnn_forward.3} parent=5 // pred_check
      _
    $region42: #{vn_dgcnn_forward.3} parent=5 // pred_check_branch
      %251 = sbr.rel (%p248) target = $region44
    $region43: #{vn_dgcnn_forward.3} parent=5 // pred_region
      %s252 = ssub.s32 %s12, 1
      %p253 = scmp.lt.s32.totalorder %s21, 1
      %s254 = scalar_select %p253, %s21, 1
      %p255 = scmp.lt.s32.totalorder %s22, 0
      %s256 = scalar_select %p255, %s22, 0
      %s257 = smul.addr %s256, 3
      %s258 = smul.addr %s254, 3
      %s259 = sadd.s32 %s257, %s258
      %s260 = smul.addr %s259, 4
      %s261 = scalar_lea.vmem %s0, %s260
      %p262 = pneg %p52
      %p263 = pneg %p49
      %p264 = scmp.lt.s32.totalorder %s21, 1
      %s265 = scalar_select %p264, %s21, 1
      %p266 = scmp.lt.s32.totalorder %s22, 0
      %s267 = scalar_select %p266, %s22, 0
      %s268 = smul.addr %s267, 3
      %s269 = smul.addr %s265, 3
      %s270 = sadd.s32 %s268, %s269
      %s271 = scalar_lea.vmem %s1, %s270
      %p272 = pneg %p80
      %p273 = pneg %p77
      %p274 = pneg %p101
      %p275 = pneg %p98
      %p276 = pneg %p122
      %p277 = pneg %p119
      %p278 = pneg %p143
      %p279 = pneg %p140
      %p280 = pneg %p164
      %p281 = pneg %p161
      %p282 = pneg %p192
      %p283 = pneg %p189
      %p284 = scmp.lt.s32.totalorder %s21, 1
      %s285 = scalar_select %p284, %s21, 1
      %p286 = scmp.lt.s32.totalorder %s22, 0
      %s287 = scalar_select %p286, %s22, 0
      %s288 = smul.addr %s285, 3
      %s289 = sadd.s32 %s287, %s288
      %s290 = smul.addr %s289, 8
      %s291 = scalar_lea.vmem %s6, %s290
      %p292 = scmp.lt.s32.totalorder %s21, 1
      %s293 = scalar_select %p292, %s21, 1
      %p294 = scmp.lt.s32.totalorder %s22, 0
      %s295 = scalar_select %p294, %s22, 0
      %s296 = smul.addr %s295, 3
      %s297 = smul.addr %s293, 3
      %s298 = sadd.s32 %s296, %s297
      %s299 = smul.addr %s298, 4
      %s300 = scalar_lea.vmem %s0, %s299
      %p301 = scmp.lt.s32.totalorder %s21, 1
      %s302 = scalar_select %p301, %s21, 1
      %p303 = scmp.lt.s32.totalorder %s22, 0
      %s304 = scalar_select %p303, %s22, 0
      %s305 = smul.addr %s304, 3
      %s306 = smul.addr %s302, 3
      %s307 = sadd.s32 %s305, %s306
      %s308 = scalar_lea.vmem %s1, %s307
      %p309 = scmp.lt.s32.totalorder %s21, 1
      %s310 = scalar_select %p309, %s21, 1
      %p311 = scmp.lt.s32.totalorder %s22, 0
      %s312 = scalar_select %p311, %s22, 0
      %s313 = smul.addr %s310, 3
      %s314 = sadd.s32 %s312, %s313
      %s315 = smul.addr %s314, 8
      %s316 = scalar_lea.vmem %s6, %s315
      %v318 = vld [vmem:[%s2] sm:$0xf]
      %v319 = vld [vmem:[%s2 + $0x4] sm:$0xf]
      %v320 = vld [vmem:[%s4] sm:$0xff]
      %v321 = vld [vmem:[%s5] sm:$0xff]
      %v322 = vld [vmem:[%s3] sm:$0xf]
      %v323 = vld [vmem:[%s3 + $0x4] sm:$0xf]
      %v324 = vld [vmem:[%s308] sm:$0x7]
      %v327 = vunpack.c.l.b16 %v322
      %v328 = vunpack.c.l.b16 %v323
      %v329 = vpack.c.b16 %v328, %v327
      %331 = vst [vmem:[#allocation1] ss:$9 sm:$0xff] %v324
      %v332 = vld [vmem:[#allocation1] sm:$0xff]
      %v333 = vld [vmem:[#allocation1 + $0x9] sm:$0xff]
      %v334 = vld [vmem:[#allocation1 + $0x12] sm:$0xff]
      %vm335 = vcmask 15360
      %v337 = vsel %vm335, %v329, 0
      %vm339 = vcmask 1040384
      %v340 = vsel %vm339, %v332, 0
      %v342 = vsel %vm339, %v333, 0
      %v344 = vsel %vm339, %v334, 0
      %346 = vmatpush.bf16.msra.mxu0 0
      %347 = vmatpush.bf16.msra.mxu0 0
      %348 = vmatpush.bf16.msra.mxu0 0
      %349 = vmatpush.bf16.msra.mxu0 0
      %350 = vmatpush.bf16.msra.mxu0 0
      %351 = vmatpush.bf16.msra.mxu0 0
      %352 = vmatpush.bf16.msra.mxu0 0
      %353 = vmatpush.bf16.msra.mxu0 %v340
      %354 = vmatmul.bf16.gmra.mxu0 %v337
      %v355 = vpop.f32.mrf.mxu0
      %v356 = vadd.f32 0.0, %v355
      %v357 = vpop.f32.mrf.mxu0
      %v358 = vadd.f32 0.0, %v357
      %359 = vdwg.mxu0
      %360 = vmatpush.bf16.msra.mxu0 0
      %361 = vmatpush.bf16.msra.mxu0 0
      %362 = vmatpush.bf16.msra.mxu0 0
      %363 = vmatpush.bf16.msra.mxu0 0
      %364 = vmatpush.bf16.msra.mxu0 0
      %365 = vmatpush.bf16.msra.mxu0 0
      %366 = vmatpush.bf16.msra.mxu0 0
      %367 = vmatpush.bf16.msra.mxu0 %v342
      %368 = vmatmul.bf16.gmra.mxu0 %v337
      %v369 = vpop.f32.mrf.mxu0
      %v370 = vadd.f32 0.0, %v369
      %v371 = vpop.f32.mrf.mxu0
      %v372 = vadd.f32 0.0, %v371
      %373 = vdwg.mxu0
      %374 = vmatpush.bf16.msra.mxu0 0
      %375 = vmatpush.bf16.msra.mxu0 0
      %376 = vmatpush.bf16.msra.mxu0 0
      %377 = vmatpush.bf16.msra.mxu0 0
      %378 = vmatpush.bf16.msra.mxu0 0
      %379 = vmatpush.bf16.msra.mxu0 0
      %380 = vmatpush.bf16.msra.mxu0 0
      %381 = vmatpush.bf16.msra.mxu0 %v344
      %382 = vmatmul.bf16.gmra.mxu0 %v337
      %v383 = vpop.f32.mrf.mxu0
      %v384 = vadd.f32 0.0, %v383
      %v385 = vpop.f32.mrf.mxu0
      %v386 = vadd.f32 0.0, %v385
      %387 = vdwg.mxu0
      %388 = vst [vmem:[#allocation2] sm:$0xff] 0.0
      %389 = vst [vmem:[#allocation2 + $0x8] sm:$0xff] 0.0
      %390 = vst [vmem:[#allocation2 + $0x10] sm:$0xff] 0.0
      %v391 = vld [vmem:[%s300] sm:$0x11]
      %v392 = vld [vmem:[%s300 + $0x8] sm:$0x1]
      %v395 = vunpack.c.l.b16 %v318
      %v396 = vunpack.c.l.b16 %v319
      %v397 = vpack.c.b16 %v396, %v395
      %v400 = vunpack.c.l.b16 %v391
      %v401 = vunpack.c.h.b16 %v391
      %v402 = vunpack.c.l.b16 %v392
      %v403 = vpack.c.b16 %v400, %v400
      %v404 = vpack.c.b16 %v401, %v401
      %v405 = vpack.c.b16 %v402, %v402
      %v407 = vsel %vm335, %v397, 0
      %v410 = vsel %vm339, %v403, 0
      %v413 = vsel %vm339, %v404, 0
      %v416 = vsel %vm339, %v405, 0
      %418 = vmatpush.bf16.msra.mxu0 0
      %419 = vmatpush.bf16.msra.mxu0 0
      %420 = vmatpush.bf16.msra.mxu0 0
      %421 = vmatpush.bf16.msra.mxu0 0
      %422 = vmatpush.bf16.msra.mxu0 0
      %423 = vmatpush.bf16.msra.mxu0 0
      %424 = vmatpush.bf16.msra.mxu0 0
      %425 = vmatpush.bf16.msra.mxu0 %v410
      %426 = vmatmul.bf16.gmra.mxu0 %v407
      %v427 = vpop.f32.mrf.mxu0
      %v428 = vadd.f32 %v356, %v427
      %v429 = vpop.f32.mrf.mxu0
      %v430 = vadd.f32 %v358, %v429
      %431 = vdwg.mxu0
      %432 = vmatpush.bf16.msra.mxu0 0
      %433 = vmatpush.bf16.msra.mxu0 0
      %434 = vmatpush.bf16.msra.mxu0 0
      %435 = vmatpush.bf16.msra.mxu0 0
      %436 = vmatpush.bf16.msra.mxu0 0
      %437 = vmatpush.bf16.msra.mxu0 0
      %438 = vmatpush.bf16.msra.mxu0 0
      %439 = vmatpush.bf16.msra.mxu0 %v413
      %440 = vmatmul.bf16.gmra.mxu0 %v407
      %v441 = vpop.f32.mrf.mxu0
      %v442 = vadd.f32 %v370, %v441
      %v443 = vpop.f32.mrf.mxu0
      %v444 = vadd.f32 %v372, %v443
      %445 = vdwg.mxu0
      %446 = vmatpush.bf16.msra.mxu0 0
      %447 = vmatpush.bf16.msra.mxu0 0
      %448 = vmatpush.bf16.msra.mxu0 0
      %449 = vmatpush.bf16.msra.mxu0 0
      %450 = vmatpush.bf16.msra.mxu0 0
      %451 = vmatpush.bf16.msra.mxu0 0
      %452 = vmatpush.bf16.msra.mxu0 0
      %453 = vmatpush.bf16.msra.mxu0 %v416
      %454 = vmatmul.bf16.gmra.mxu0 %v407
      %v455 = vpop.f32.mrf.mxu0
      %v456 = vadd.f32 %v384, %v455
      %v457 = vpop.f32.mrf.mxu0
      %v458 = vadd.f32 %v386, %v457
      %459 = vdwg.mxu0
      %v460 = vmul.f32 %v428, %v428
      %v461 = vmul.f32 %v442, %v442
      %v462 = vadd.f32 %v460, %v461
      %v463 = vmul.f32 %v456, %v456
      %v464 = vadd.f32 %v462, %v463
      %v465 = vrsqrt.pop %v464
      %v466 = vmul.f32 %v465, %v464
      %v467 = vmul.f32 %v466, %v465
      %v468 = vmul.f32 0.5, %v467
      %v469 = vsub.f32 1.5, %v468
      %v470 = vmul.f32 %v465, %v469
      %v471 = vmul.f32 %v464, %v470
      %vm472 = vcmp.eq.f32.partialorder %v464, inf
      %v473 = vsel %vm472, %v464, %v471
      %vm474 = vcmp.eq.f32.partialorder %v464, 0.0
      %v475 = vand.u32 %v464, 2147483648
      %v476 = vsel %vm474, %v475, %v473
      %v477 = vadd.f32 %v476, 1e-06
      %479 = vset.pattern.permute.xlu0 0
      %480 = vperm.xlu0 %479, %v320
      %v481 = vpop.permute.xlu0 %480
      %v483 = vsub.f32 %v477, %v481
      %485 = vset.pattern.permute.xlu0 0
      %486 = vperm.xlu0 %485, %v321
      %v487 = vpop.permute.xlu0 %486
      %v489 = vmul.f32 %v483, %v487
      %v490 = vrcp.pop %v477
      %v491 = vmul.f32 %v477, %v490
      %v492 = vsub.f32 1.0, %v491
      %v493 = vmul.f32 %v490, %v492
      %v494 = vadd.f32 %v490, %v493
      %vm495 = vweird.f32 %v477
      %vm496 = vweird.f32 %v490
      %vm497 = vmor %vm495, %vm496
      %v498 = vsel %vm497, %v490, %v494
      %v499 = vand.u32 2147483647, %v477
      %vm500 = vcmp.eq.f32.partialorder %v499, 8.507059e+37
      %v501 = vand.u32 %v477, 2147483648
      %v502 = vor.u32 1.1754944e-38, %v501
      %v503 = vsel %vm500, %v502, %v498
      %v504 = vmul.f32 %v489, %v503
      %v505 = vmul.f32 %v428, %v430
      %v506 = vmul.f32 %v442, %v444
      %v507 = vadd.f32 %v505, %v506
      %v508 = vmul.f32 %v456, %v458
      %v509 = vadd.f32 %v507, %v508
      %v510 = vmul.f32 %v509, %v504
      %v511 = vmul.f32 %v430, %v430
      %v512 = vmul.f32 %v444, %v444
      %v513 = vadd.f32 %v511, %v512
      %v514 = vmul.f32 %v458, %v458
      %v515 = vadd.f32 %v513, %v514
      %vm516 = vcmp.lt.f32.partialorder %v510, 0.0
      %v517 = vadd.f32 %v515, 1e-06
      %v518 = vrcp.pop %v517
      %v519 = vmul.f32 %v517, %v518
      %v520 = vsub.f32 1.0, %v519
      %v521 = vmul.f32 %v518, %v520
      %v522 = vadd.f32 %v518, %v521
      %vm523 = vweird.f32 %v517
      %vm524 = vweird.f32 %v518
      %vm525 = vmor %vm523, %vm524
      %v526 = vsel %vm525, %v518, %v522
      %v527 = vand.u32 2147483647, %v517
      %vm528 = vcmp.eq.f32.partialorder %v527, 8.507059e+37
      %v529 = vand.u32 %v517, 2147483648
      %v530 = vor.u32 1.1754944e-38, %v529
      %v531 = vsel %vm528, %v530, %v526
      %v532 = vmul.f32 %v510, %v531
      %v533 = vsel %vm516, %v532, 0.0
      %v534 = vld [vmem:[#allocation2] sm:$0xff]
      %v535 = vld [vmem:[#allocation2 + $0x8] sm:$0xff]
      %v536 = vld [vmem:[#allocation2 + $0x10] sm:$0xff]
      %v537 = vmul.f32 %v428, %v504
      %v538 = vmul.f32 %v442, %v504
      %v539 = vmul.f32 %v456, %v504
      %v540 = vmul.f32 %v533, 0.8
      %v541 = vmul.f32 %v540, %v430
      %v542 = vmul.f32 %v540, %v444
      %v543 = vmul.f32 %v540, %v458
      %v544 = vsub.f32 %v537, %v541
      %v545 = vsub.f32 %v538, %v542
      %v546 = vsub.f32 %v539, %v543
      %v547 = vadd.f32 %v534, %v544
      %v548 = vadd.f32 %v535, %v545
      %v549 = vadd.f32 %v536, %v546
      %550 = vst [vmem:[#allocation2] sm:$0xff] %v547
      %551 = vst [vmem:[#allocation2 + $0x8] sm:$0xff] %v548
      %552 = vst [vmem:[#allocation2 + $0x10] sm:$0xff] %v549
      %v553 = vld [vmem:[%s300] sm:$0x22]
      %v554 = vld [vmem:[%s300 + $0x8] sm:$0x2]
      %v557 = vunpack.c.l.b16 %v553
      %v558 = vunpack.c.h.b16 %v553
      %v559 = vunpack.c.l.b16 %v554
      %v560 = vpack.c.b16 %v557, %v557
      %v561 = vpack.c.b16 %v558, %v558
      %v562 = vpack.c.b16 %v559, %v559
      %v563 = vrot.slane %v560, 1
      %v564 = vrot.slane %v561, 1
      %v565 = vrot.slane %v562, 1
      %v567 = vsel %vm339, %v563, 0
      %v570 = vsel %vm339, %v564, 0
      %v573 = vsel %vm339, %v565, 0
      %575 = vmatpush.bf16.msra.mxu0 0
      %576 = vmatpush.bf16.msra.mxu0 0
      %577 = vmatpush.bf16.msra.mxu0 0
      %578 = vmatpush.bf16.msra.mxu0 0
      %579 = vmatpush.bf16.msra.mxu0 0
      %580 = vmatpush.bf16.msra.mxu0 0
      %581 = vmatpush.bf16.msra.mxu0 0
      %582 = vmatpush.bf16.msra.mxu0 %v567
      %583 = vmatmul.bf16.gmra.mxu0 %v407
      %v584 = vpop.f32.mrf.mxu0
      %v585 = vadd.f32 %v356, %v584
      %v586 = vpop.f32.mrf.mxu0
      %v587 = vadd.f32 %v358, %v586
      %588 = vdwg.mxu0
      %589 = vmatpush.bf16.msra.mxu0 0
      %590 = vmatpush.bf16.msra.mxu0 0
      %591 = vmatpush.bf16.msra.mxu0 0
      %592 = vmatpush.bf16.msra.mxu0 0
      %593 = vmatpush.bf16.msra.mxu0 0
      %594 = vmatpush.bf16.msra.mxu0 0
      %595 = vmatpush.bf16.msra.mxu0 0
      %596 = vmatpush.bf16.msra.mxu0 %v570
      %597 = vmatmul.bf16.gmra.mxu0 %v407
      %v598 = vpop.f32.mrf.mxu0
      %v599 = vadd.f32 %v370, %v598
      %v600 = vpop.f32.mrf.mxu0
      %v601 = vadd.f32 %v372, %v600
      %602 = vdwg.mxu0
      %603 = vmatpush.bf16.msra.mxu0 0
      %604 = vmatpush.bf16.msra.mxu0 0
      %605 = vmatpush.bf16.msra.mxu0 0
      %606 = vmatpush.bf16.msra.mxu0 0
      %607 = vmatpush.bf16.msra.mxu0 0
      %608 = vmatpush.bf16.msra.mxu0 0
      %609 = vmatpush.bf16.msra.mxu0 0
      %610 = vmatpush.bf16.msra.mxu0 %v573
      %611 = vmatmul.bf16.gmra.mxu0 %v407
      %v612 = vpop.f32.mrf.mxu0
      %v613 = vadd.f32 %v384, %v612
      %v614 = vpop.f32.mrf.mxu0
      %v615 = vadd.f32 %v386, %v614
      %616 = vdwg.mxu0
      %v617 = vmul.f32 %v585, %v585
      %v618 = vmul.f32 %v599, %v599
      %v619 = vadd.f32 %v617, %v618
      %v620 = vmul.f32 %v613, %v613
      %v621 = vadd.f32 %v619, %v620
      %v622 = vrsqrt.pop %v621
      %v623 = vmul.f32 %v622, %v621
      %v624 = vmul.f32 %v623, %v622
      %v625 = vmul.f32 0.5, %v624
      %v626 = vsub.f32 1.5, %v625
      %v627 = vmul.f32 %v622, %v626
      %v628 = vmul.f32 %v621, %v627
      %vm629 = vcmp.eq.f32.partialorder %v621, inf
      %v630 = vsel %vm629, %v621, %v628
      %vm631 = vcmp.eq.f32.partialorder %v621, 0.0
      %v632 = vand.u32 %v621, 2147483648
      %v633 = vsel %vm631, %v632, %v630
      %v634 = vadd.f32 %v633, 1e-06
      %v635 = vsub.f32 %v634, %v481
      %v636 = vmul.f32 %v635, %v487
      %v637 = vrcp.pop %v634
      %v638 = vmul.f32 %v634, %v637
      %v639 = vsub.f32 1.0, %v638
      %v640 = vmul.f32 %v637, %v639
      %v641 = vadd.f32 %v637, %v640
      %vm642 = vweird.f32 %v634
      %vm643 = vweird.f32 %v637
      %vm644 = vmor %vm642, %vm643
      %v645 = vsel %vm644, %v637, %v641
      %v646 = vand.u32 2147483647, %v634
      %vm647 = vcmp.eq.f32.partialorder %v646, 8.507059e+37
      %v648 = vand.u32 %v634, 2147483648
      %v649 = vor.u32 1.1754944e-38, %v648
      %v650 = vsel %vm647, %v649, %v645
      %v651 = vmul.f32 %v636, %v650
      %v652 = vmul.f32 %v585, %v587
      %v653 = vmul.f32 %v599, %v601
      %v654 = vadd.f32 %v652, %v653
      %v655 = vmul.f32 %v613, %v615
      %v656 = vadd.f32 %v654, %v655
      %v657 = vmul.f32 %v656, %v651
      %v658 = vmul.f32 %v587, %v587
      %v659 = vmul.f32 %v601, %v601
      %v660 = vadd.f32 %v658, %v659
      %v661 = vmul.f32 %v615, %v615
      %v662 = vadd.f32 %v660, %v661
      %vm663 = vcmp.lt.f32.partialorder %v657, 0.0
      %v664 = vadd.f32 %v662, 1e-06
      %v665 = vrcp.pop %v664
      %v666 = vmul.f32 %v664, %v665
      %v667 = vsub.f32 1.0, %v666
      %v668 = vmul.f32 %v665, %v667
      %v669 = vadd.f32 %v665, %v668
      %vm670 = vweird.f32 %v664
      %vm671 = vweird.f32 %v665
      %vm672 = vmor %vm670, %vm671
      %v673 = vsel %vm672, %v665, %v669
      %v674 = vand.u32 2147483647, %v664
      %vm675 = vcmp.eq.f32.partialorder %v674, 8.507059e+37
      %v676 = vand.u32 %v664, 2147483648
      %v677 = vor.u32 1.1754944e-38, %v676
      %v678 = vsel %vm675, %v677, %v673
      %v679 = vmul.f32 %v657, %v678
      %v680 = vsel %vm663, %v679, 0.0
      %v681 = vld [vmem:[#allocation2] sm:$0xff]
      %v682 = vld [vmem:[#allocation2 + $0x8] sm:$0xff]
      %v683 = vld [vmem:[#allocation2 + $0x10] sm:$0xff]
      %v684 = vmul.f32 %v585, %v651
      %v685 = vmul.f32 %v599, %v651
      %v686 = vmul.f32 %v613, %v651
      %v687 = vmul.f32 %v680, 0.8
      %v688 = vmul.f32 %v687, %v587
      %v689 = vmul.f32 %v687, %v601
      %v690 = vmul.f32 %v687, %v615
      %v691 = vsub.f32 %v684, %v688
      %v692 = vsub.f32 %v685, %v689
      %v693 = vsub.f32 %v686, %v690
      %v694 = vadd.f32 %v681, %v691
      %v695 = vadd.f32 %v682, %v692
      %v696 = vadd.f32 %v683, %v693
      %697 = vst [vmem:[#allocation2] sm:$0xff] %v694
      %698 = vst [vmem:[#allocation2 + $0x8] sm:$0xff] %v695
      %699 = vst [vmem:[#allocation2 + $0x10] sm:$0xff] %v696
      %v700 = vld [vmem:[%s300] sm:$0x44]
      %v701 = vld [vmem:[%s300 + $0x8] sm:$0x4]
      %v704 = vunpack.c.l.b16 %v700
      %v705 = vunpack.c.h.b16 %v700
      %v706 = vunpack.c.l.b16 %v701
      %v707 = vpack.c.b16 %v704, %v704
      %v708 = vpack.c.b16 %v705, %v705
      %v709 = vpack.c.b16 %v706, %v706
      %v710 = vrot.slane %v707, 2
      %v711 = vrot.slane %v708, 2
      %v712 = vrot.slane %v709, 2
      %v714 = vsel %vm339, %v710, 0
      %v717 = vsel %vm339, %v711, 0
      %v720 = vsel %vm339, %v712, 0
      %722 = vmatpush.bf16.msra.mxu0 0
      %723 = vmatpush.bf16.msra.mxu0 0
      %724 = vmatpush.bf16.msra.mxu0 0
      %725 = vmatpush.bf16.msra.mxu0 0
      %726 = vmatpush.bf16.msra.mxu0 0
      %727 = vmatpush.bf16.msra.mxu0 0
      %728 = vmatpush.bf16.msra.mxu0 0
      %729 = vmatpush.bf16.msra.mxu0 %v714
      %730 = vmatmul.bf16.gmra.mxu0 %v407
      %v731 = vpop.f32.mrf.mxu0
      %v732 = vadd.f32 %v356, %v731
      %v733 = vpop.f32.mrf.mxu0
      %v734 = vadd.f32 %v358, %v733
      %735 = vdwg.mxu0
      %736 = vmatpush.bf16.msra.mxu0 0
      %737 = vmatpush.bf16.msra.mxu0 0
      %738 = vmatpush.bf16.msra.mxu0 0
      %739 = vmatpush.bf16.msra.mxu0 0
      %740 = vmatpush.bf16.msra.mxu0 0
      %741 = vmatpush.bf16.msra.mxu0 0
      %742 = vmatpush.bf16.msra.mxu0 0
      %743 = vmatpush.bf16.msra.mxu0 %v717
      %744 = vmatmul.bf16.gmra.mxu0 %v407
      %v745 = vpop.f32.mrf.mxu0
      %v746 = vadd.f32 %v370, %v745
      %v747 = vpop.f32.mrf.mxu0
      %v748 = vadd.f32 %v372, %v747
      %749 = vdwg.mxu0
      %750 = vmatpush.bf16.msra.mxu0 0
      %751 = vmatpush.bf16.msra.mxu0 0
      %752 = vmatpush.bf16.msra.mxu0 0
      %753 = vmatpush.bf16.msra.mxu0 0
      %754 = vmatpush.bf16.msra.mxu0 0
      %755 = vmatpush.bf16.msra.mxu0 0
      %756 = vmatpush.bf16.msra.mxu0 0
      %757 = vmatpush.bf16.msra.mxu0 %v720
      %758 = vmatmul.bf16.gmra.mxu0 %v407
      %v759 = vpop.f32.mrf.mxu0
      %v760 = vadd.f32 %v384, %v759
      %v761 = vpop.f32.mrf.mxu0
      %v762 = vadd.f32 %v386, %v761
      %763 = vdwg.mxu0
      %v764 = vmul.f32 %v732, %v732
      %v765 = vmul.f32 %v746, %v746
      %v766 = vadd.f32 %v764, %v765
      %v767 = vmul.f32 %v760, %v760
      %v768 = vadd.f32 %v766, %v767
      %v769 = vrsqrt.pop %v768
      %v770 = vmul.f32 %v769, %v768
      %v771 = vmul.f32 %v770, %v769
      %v772 = vmul.f32 0.5, %v771
      %v773 = vsub.f32 1.5, %v772
      %v774 = vmul.f32 %v769, %v773
      %v775 = vmul.f32 %v768, %v774
      %vm776 = vcmp.eq.f32.partialorder %v768, inf
      %v777 = vsel %vm776, %v768, %v775
      %vm778 = vcmp.eq.f32.partialorder %v768, 0.0
      %v779 = vand.u32 %v768, 2147483648
      %v780 = vsel %vm778, %v779, %v777
      %v781 = vadd.f32 %v780, 1e-06
      %v782 = vsub.f32 %v781, %v481
      %v783 = vmul.f32 %v782, %v487
      %v784 = vrcp.pop %v781
      %v785 = vmul.f32 %v781, %v784
      %v786 = vsub.f32 1.0, %v785
      %v787 = vmul.f32 %v784, %v786
      %v788 = vadd.f32 %v784, %v787
      %vm789 = vweird.f32 %v781
      %vm790 = vweird.f32 %v784
      %vm791 = vmor %vm789, %vm790
      %v792 = vsel %vm791, %v784, %v788
      %v793 = vand.u32 2147483647, %v781
      %vm794 = vcmp.eq.f32.partialorder %v793, 8.507059e+37
      %v795 = vand.u32 %v781, 2147483648
      %v796 = vor.u32 1.1754944e-38, %v795
      %v797 = vsel %vm794, %v796, %v792
      %v798 = vmul.f32 %v783, %v797
      %v799 = vmul.f32 %v732, %v734
      %v800 = vmul.f32 %v746, %v748
      %v801 = vadd.f32 %v799, %v800
      %v802 = vmul.f32 %v760, %v762
      %v803 = vadd.f32 %v801, %v802
      %v804 = vmul.f32 %v803, %v798
      %v805 = vmul.f32 %v734, %v734
      %v806 = vmul.f32 %v748, %v748
      %v807 = vadd.f32 %v805, %v806
      %v808 = vmul.f32 %v762, %v762
      %v809 = vadd.f32 %v807, %v808
      %vm810 = vcmp.lt.f32.partialorder %v804, 0.0
      %v811 = vadd.f32 %v809, 1e-06
      %v812 = vrcp.pop %v811
      %v813 = vmul.f32 %v811, %v812
      %v814 = vsub.f32 1.0, %v813
      %v815 = vmul.f32 %v812, %v814
      %v816 = vadd.f32 %v812, %v815
      %vm817 = vweird.f32 %v811
      %vm818 = vweird.f32 %v812
      %vm819 = vmor %vm817, %vm818
      %v820 = vsel %vm819, %v812, %v816
      %v821 = vand.u32 2147483647, %v811
      %vm822 = vcmp.eq.f32.partialorder %v821, 8.507059e+37
      %v823 = vand.u32 %v811, 2147483648
      %v824 = vor.u32 1.1754944e-38, %v823
      %v825 = vsel %vm822, %v824, %v820
      %v826 = vmul.f32 %v804, %v825
      %v827 = vsel %vm810, %v826, 0.0
      %v828 = vld [vmem:[#allocation2] sm:$0xff]
      %v829 = vld [vmem:[#allocation2 + $0x8] sm:$0xff]
      %v830 = vld [vmem:[#allocation2 + $0x10] sm:$0xff]
      %v831 = vmul.f32 %v732, %v798
      %v832 = vmul.f32 %v746, %v798
      %v833 = vmul.f32 %v760, %v798
      %v834 = vmul.f32 %v827, 0.8
      %v835 = vmul.f32 %v834, %v734
      %v836 = vmul.f32 %v834, %v748
      %v837 = vmul.f32 %v834, %v762
      %v838 = vsub.f32 %v831, %v835
      %v839 = vsub.f32 %v832, %v836
      %v840 = vsub.f32 %v833, %v837
      %v841 = vadd.f32 %v828, %v838
      %v842 = vadd.f32 %v829, %v839
      %v843 = vadd.f32 %v830, %v840
      %844 = vst [vmem:[#allocation2] sm:$0xff] %v841
      %845 = vst [vmem:[#allocation2 + $0x8] sm:$0xff] %v842
      %846 = vst [vmem:[#allocation2 + $0x10] sm:$0xff] %v843
      %v847 = vld [vmem:[%s300] sm:$0x88]
      %v848 = vld [vmem:[%s300 + $0x8] sm:$0x8]
      %v851 = vunpack.c.l.b16 %v847
      %v852 = vunpack.c.h.b16 %v847
      %v853 = vunpack.c.l.b16 %v848
      %v854 = vpack.c.b16 %v851, %v851
      %v855 = vpack.c.b16 %v852, %v852
      %v856 = vpack.c.b16 %v853, %v853
      %v857 = vrot.slane %v854, 3
      %v858 = vrot.slane %v855, 3
      %v859 = vrot.slane %v856, 3
      %v861 = vsel %vm339, %v857, 0
      %v864 = vsel %vm339, %v858, 0
      %v867 = vsel %vm339, %v859, 0
      %869 = vmatpush.bf16.msra.mxu0 0
      %870 = vmatpush.bf16.msra.mxu0 0
      %871 = vmatpush.bf16.msra.mxu0 0
      %872 = vmatpush.bf16.msra.mxu0 0
      %873 = vmatpush.bf16.msra.mxu0 0
      %874 = vmatpush.bf16.msra.mxu0 0
      %875 = vmatpush.bf16.msra.mxu0 0
      %876 = vmatpush.bf16.msra.mxu0 %v861
      %877 = vmatmul.bf16.gmra.mxu0 %v407
      %v878 = vpop.f32.mrf.mxu0
      %v879 = vadd.f32 %v356, %v878
      %v880 = vpop.f32.mrf.mxu0
      %v881 = vadd.f32 %v358, %v880
      %882 = vdwg.mxu0
      %883 = vmatpush.bf16.msra.mxu0 0
      %884 = vmatpush.bf16.msra.mxu0 0
      %885 = vmatpush.bf16.msra.mxu0 0
      %886 = vmatpush.bf16.msra.mxu0 0
      %887 = vmatpush.bf16.msra.mxu0 0
      %888 = vmatpush.bf16.msra.mxu0 0
      %889 = vmatpush.bf16.msra.mxu0 0
      %890 = vmatpush.bf16.msra.mxu0 %v864
      %891 = vmatmul.bf16.gmra.mxu0 %v407
      %v892 = vpop.f32.mrf.mxu0
      %v893 = vadd.f32 %v370, %v892
      %v894 = vpop.f32.mrf.mxu0
      %v895 = vadd.f32 %v372, %v894
      %896 = vdwg.mxu0
      %897 = vmatpush.bf16.msra.mxu0 0
      %898 = vmatpush.bf16.msra.mxu0 0
      %899 = vmatpush.bf16.msra.mxu0 0
      %900 = vmatpush.bf16.msra.mxu0 0
      %901 = vmatpush.bf16.msra.mxu0 0
      %902 = vmatpush.bf16.msra.mxu0 0
      %903 = vmatpush.bf16.msra.mxu0 0
      %904 = vmatpush.bf16.msra.mxu0 %v867
      %905 = vmatmul.bf16.gmra.mxu0 %v407
      %v906 = vpop.f32.mrf.mxu0
      %v907 = vadd.f32 %v384, %v906
      %v908 = vpop.f32.mrf.mxu0
      %v909 = vadd.f32 %v386, %v908
      %910 = vdwg.mxu0
      %v911 = vmul.f32 %v879, %v879
      %v912 = vmul.f32 %v893, %v893
      %v913 = vadd.f32 %v911, %v912
      %v914 = vmul.f32 %v907, %v907
      %v915 = vadd.f32 %v913, %v914
      %v916 = vrsqrt.pop %v915
      %v917 = vmul.f32 %v916, %v915
      %v918 = vmul.f32 %v917, %v916
      %v919 = vmul.f32 0.5, %v918
      %v920 = vsub.f32 1.5, %v919
      %v921 = vmul.f32 %v916, %v920
      %v922 = vmul.f32 %v915, %v921
      %vm923 = vcmp.eq.f32.partialorder %v915, inf
      %v924 = vsel %vm923, %v915, %v922
      %vm925 = vcmp.eq.f32.partialorder %v915, 0.0
      %v926 = vand.u32 %v915, 2147483648
      %v927 = vsel %vm925, %v926, %v924
      %v928 = vadd.f32 %v927, 1e-06
      %v929 = vsub.f32 %v928, %v481
      %v930 = vmul.f32 %v929, %v487
      %v931 = vrcp.pop %v928
      %v932 = vmul.f32 %v928, %v931
      %v933 = vsub.f32 1.0, %v932
      %v934 = vmul.f32 %v931, %v933
      %v935 = vadd.f32 %v931, %v934
      %vm936 = vweird.f32 %v928
      %vm937 = vweird.f32 %v931
      %vm938 = vmor %vm936, %vm937
      %v939 = vsel %vm938, %v931, %v935
      %v940 = vand.u32 2147483647, %v928
      %vm941 = vcmp.eq.f32.partialorder %v940, 8.507059e+37
      %v942 = vand.u32 %v928, 2147483648
      %v943 = vor.u32 1.1754944e-38, %v942
      %v944 = vsel %vm941, %v943, %v939
      %v945 = vmul.f32 %v930, %v944
      %v946 = vmul.f32 %v879, %v881
      %v947 = vmul.f32 %v893, %v895
      %v948 = vadd.f32 %v946, %v947
      %v949 = vmul.f32 %v907, %v909
      %v950 = vadd.f32 %v948, %v949
      %v951 = vmul.f32 %v950, %v945
      %v952 = vmul.f32 %v881, %v881
      %v953 = vmul.f32 %v895, %v895
      %v954 = vadd.f32 %v952, %v953
      %v955 = vmul.f32 %v909, %v909
      %v956 = vadd.f32 %v954, %v955
      %vm957 = vcmp.lt.f32.partialorder %v951, 0.0
      %v958 = vadd.f32 %v956, 1e-06
      %v959 = vrcp.pop %v958
      %v960 = vmul.f32 %v958, %v959
      %v961 = vsub.f32 1.0, %v960
      %v962 = vmul.f32 %v959, %v961
      %v963 = vadd.f32 %v959, %v962
      %vm964 = vweird.f32 %v958
      %vm965 = vweird.f32 %v959
      %vm966 = vmor %vm964, %vm965
      %v967 = vsel %vm966, %v959, %v963
      %v968 = vand.u32 2147483647, %v958
      %vm969 = vcmp.eq.f32.partialorder %v968, 8.507059e+37
      %v970 = vand.u32 %v958, 2147483648
      %v971 = vor.u32 1.1754944e-38, %v970
      %v972 = vsel %vm969, %v971, %v967
      %v973 = vmul.f32 %v951, %v972
      %v974 = vsel %vm957, %v973, 0.0
      %v975 = vld [vmem:[#allocation2] sm:$0xff]
      %v976 = vld [vmem:[#allocation2 + $0x8] sm:$0xff]
      %v977 = vld [vmem:[#allocation2 + $0x10] sm:$0xff]
      %v978 = vmul.f32 %v879, %v945
      %v979 = vmul.f32 %v893, %v945
      %v980 = vmul.f32 %v907, %v945
      %v981 = vmul.f32 %v974, 0.8
      %v982 = vmul.f32 %v981, %v881
      %v983 = vmul.f32 %v981, %v895
      %v984 = vmul.f32 %v981, %v909
      %v985 = vsub.f32 %v978, %v982
      %v986 = vsub.f32 %v979, %v983
      %v987 = vsub.f32 %v980, %v984
      %v988 = vadd.f32 %v975, %v985
      %v989 = vadd.f32 %v976, %v986
      %v990 = vadd.f32 %v977, %v987
      %991 = vst [vmem:[#allocation2] sm:$0xff] %v988
      %992 = vst [vmem:[#allocation2 + $0x8] sm:$0xff] %v989
      %993 = vst [vmem:[#allocation2 + $0x10] sm:$0xff] %v990
      %v994 = vld [vmem:[#allocation2] sm:$0xff]
      %v995 = vld [vmem:[#allocation2 + $0x8] sm:$0xff]
      %v996 = vld [vmem:[#allocation2 + $0x10] sm:$0xff]
      %v997 = vmul.f32 %v994, 0.25
      %v998 = vmul.f32 %v995, 0.25
      %v999 = vmul.f32 %v996, 0.25
      %1000 = vst [vmem:[%s316] sm:$0xff] %v997
      %s1001 = scalar_lea.vmem %s316, 8
      %1002 = vst [vmem:[%s1001] sm:$0xff] %v998
      %s1003 = scalar_lea.vmem %s316, 16
      %1004 = vst [vmem:[%s1003] sm:$0xff] %v999
      %p1005 = scmp.lt.s32.totalorder %s21, 1
      %s1006 = scalar_select %p1005, %s21, 1
      %p1007 = scmp.lt.s32.totalorder %s22, 0
      %s1008 = scalar_select %p1007, %s22, 0
      %s1009 = smul.addr %s1006, 3
      %s1010 = sadd.s32 %s1008, %s1009
      %s1011 = smul.addr %s1010, 8
      %s1012 = scalar_lea.vmem %s6, %s1011
      // Predicated region
      $region45: #{vn_dgcnn_forward.3} parent=43 // pred_check
        %p1013 = pneg %p189
      $region46: #{vn_dgcnn_forward.3} parent=43 // pred_check_branch
        %1015 = sbr.rel (%p1013) target = $region48
      $region47: #{vn_dgcnn_forward.3} parent=43 // pred_region
        _
      $region48: #{vn_dgcnn_forward.3} parent=43 // pred_fallthru
        _
    $region44: #{vn_dgcnn_forward.3} parent=5 // pred_fallthru
      _
    %p1016 = scmp.le.s32.totalorder 2, %s12
    // Predicated region
    $region49: #{vn_dgcnn_forward.3} parent=5 // pred_check
      %p1017 = pneg %p1016
    $region50: #{vn_dgcnn_forward.3} parent=5 // pred_check_branch
      %1019 = sbr.rel (%p1017) target = $region52
    $region51: #{vn_dgcnn_forward.3} parent=5 // pred_region
      %s1020 = ssub.s32 %s12, 2
      // Predicated region
      $region53: #{vn_dgcnn_forward.3} parent=51 // pred_check
        %p1021 = pneg %p195
      $region54: #{vn_dgcnn_forward.3} parent=51 // pred_check_branch
        %1023 = sbr.rel (%p1021) target = $region56
      $region55: #{vn_dgcnn_forward.3} parent=51 // pred_region
        %p1024 = scmp.lt.s32.totalorder %s23, 1
        %s1025 = scalar_select %p1024, %s23, 1
        %p1026 = scmp.lt.s32.totalorder %s24, 0
        %s1027 = scalar_select %p1026, %s24, 0
        %s1028 = smul.addr %s1025, 3
        %s1029 = sadd.s32 %s1027, %s1028
        %s1030 = smul.addr %s1029, 8
        %s1031 = scalar_lea.vmem %s6, %s1030
      $region56: #{vn_dgcnn_forward.3} parent=51 // pred_fallthru
        _
    $region52: #{vn_dgcnn_forward.3} parent=5 // pred_fallthru
      _
  $region6: #{vn_dgcnn_forward.3} parent=0 // loop_footer
    %s16 = sadd.s32 1, %s12
  $region7: #{vn_dgcnn_forward.3} parent=0 // loop_footer_branch
    %11 = sbr.rel target = $region3
  $region8: #{vn_dgcnn_forward.3} parent=0 // loop_exit
    _

</llo_original>
